<compile_context>
chip_gen: v6e
topology: v6e:2x2x1
jax: 0.10.0
libtpu: 0.0.40
codegen_flags: <defaults>
</compile_context>

<pallas_src>
import functools
import math

import jax
import jax.numpy as jnp
from jax.experimental import pallas as pl
from jax.experimental.pallas import tpu as pltpu

# ----------------------------------------------------------------------------
# Model hyper-parameters (small, consistent with the module's __init__)
# ----------------------------------------------------------------------------
N_SPECIES = 3                       # len(all_species)
N_PSEUDO = 4                        # n_pseudo
N_MAX_L = (2, 1)                    # radial basis n_max per l  ->  l_max = 1
N_FEAT = sum(n ** 2 * N_PSEUDO ** 2 for n in N_MAX_L)   # = 80
NUM_HIDDEN = 32                     # num_hidden
WIDTH = N_PSEUDO * NUM_HIDDEN       # = 128: fused matmul width == lane width
FEAT_PAD = 128                      # feature axis zero-padded to a full lane width
TM = 128                            # atoms per kernel tile (MXU M dimension)

assert WIDTH == 128
assert FEAT_PAD >= N_FEAT and FEAT_PAD % 128 == 0

# TODO(synk): torch_spex's normalize_func("activation", SiLU()) uses an
# empirically estimated variance-preserving constant; 1.6765 ~= 1/sqrt(E[silu(z)^2])
# for z ~ N(0,1) is the deterministic stand-in.
SILU_SCALE = 1.6765

# Tiny epsilon: invisible for real data in f32 (var is O(1)), but keeps padded
# all-zero atom rows finite (0 * rsqrt(eps) = 0 instead of 0 * inf = NaN).
LN_EPS = 1e-30

# bf16 matmul operands, f32 accumulation (MXU-friendly on v5e/v6e/v7x).
MATMUL_DTYPE = jnp.bfloat16


def _silu(x):
    return x * jax.nn.sigmoid(x)


# ----------------------------------------------------------------------------
# Pallas kernel: normalize_ps + pseudo-species weighting + fused MLPs
# ----------------------------------------------------------------------------
def _alchemical_kernel(feats_ref, pw_ref, w1_ref, w2_ref, w3_ref, w4_ref, out_ref):
    # feats_ref: (TM, FEAT_PAD) f32, lanes >= N_FEAT are zero padding.
    x = feats_ref[...]
    lane = jax.lax.broadcasted_iota(jnp.int32, x.shape, dimension=1)
    valid = lane < N_FEAT

    # ---- normalize_ps over the N_FEAT real features only ----
    mean = jnp.sum(x, axis=-1, keepdims=True) * (1.0 / N_FEAT)   # padded lanes are 0
    xc = jnp.where(valid, x - mean, 0.0)
    var = jnp.sum(xc * xc, axis=-1, keepdims=True) * (1.0 / N_FEAT)
    xn = xc * jax.lax.rsqrt(var + LN_EPS)

    # ---- fused layer 1: all N_PSEUDO MLPs at once (1/sqrt(n_feat) folded in W1) ----
    h = jnp.dot(xn.astype(MATMUL_DTYPE), w1_ref[...],
                preferred_element_type=jnp.float32)              # (TM, WIDTH)
    # pseudo-species weighting: (pw * xn) @ W1 == pw * (xn @ W1) per pseudo block
    h = h * pw_ref[...]
    h = _silu(h) * SILU_SCALE

    # ---- fused layers 2 & 3: block-diagonal weights keep pseudo blocks independent ----
    h = jnp.dot(h.astype(MATMUL_DTYPE), w2_ref[...],
                preferred_element_type=jnp.float32)
    h = _silu(h) * SILU_SCALE
    h = jnp.dot(h.astype(MATMUL_DTYPE), w3_ref[...],
                preferred_element_type=jnp.float32)
    h = _silu(h) * SILU_SCALE

    # ---- fused last layer + sum over pseudo species: lane reduction against w4 ----
    # w4_ref already carries 1/sqrt(H) and 1/sqrt(n_pseudo).
    e = jnp.sum(h * w4_ref[...], axis=-1, keepdims=True)          # (TM, 1)

    # Lane-dense store: broadcast the per-atom energy across all 128 lanes so the
    # output write is a full-width unmasked vst; wrapper reads lane 0.
    out_ref[...] = jnp.broadcast_to(e, out_ref.shape)


def _atomic_energies_pallas(feats_p, pw_rep, w1p, w2p, w3p, w4r):
    n_pad = feats_p.shape[0]
    assert n_pad % TM == 0
    grid = (n_pad // TM,)
    out = pl.pallas_call(
        _alchemical_kernel,
        out_shape=jax.ShapeDtypeStruct((n_pad, WIDTH), jnp.float32),
        grid=grid,
        in_specs=[
            pl.BlockSpec((TM, FEAT_PAD), lambda i: (i, 0)),
            pl.BlockSpec((TM, WIDTH), lambda i: (i, 0)),
            pl.BlockSpec((FEAT_PAD, WIDTH), lambda i: (0, 0)),   # grid-invariant weights
            pl.BlockSpec((WIDTH, WIDTH), lambda i: (0, 0)),
            pl.BlockSpec((WIDTH, WIDTH), lambda i: (0, 0)),
            pl.BlockSpec((1, WIDTH), lambda i: (0, 0)),
        ],
        out_specs=pl.BlockSpec((TM, WIDTH), lambda i: (i, 0)),
        compiler_params=pltpu.CompilerParams(
            dimension_semantics=("parallel",)),                  # megacore split on v7x
    )(feats_p, pw_rep, w1p, w2p, w3p, w4r)
    return out[:, 0]


# ----------------------------------------------------------------------------
# Parameter packing (done once, outside the kernel)
# ----------------------------------------------------------------------------
def _block_diag(blocks):
    n = len(blocks)
    h = blocks[0].shape[0]
    out = jnp.zeros((n * h, n * h), blocks[0].dtype)
    for a, b in enumerate(blocks):
        out = out.at[a * h:(a + 1) * h, a * h:(a + 1) * h].set(b)
    return out


def pack_params(w1, w2, w3, w4):
    """Fuse the per-pseudo MLP weights into wide / block-diagonal matrices with the
    normalized-linear 1/sqrt(fan_in) factors (and 1/sqrt(n_pseudo)) folded in."""
    inv_feat = 1.0 / math.sqrt(N_FEAT)
    inv_hid = 1.0 / math.sqrt(NUM_HIDDEN)

    w1c = jnp.concatenate([w1[a] for a in range(N_PSEUDO)], axis=1) * inv_feat
    w1p = jnp.pad(w1c, ((0, FEAT_PAD - N_FEAT), (0, 0)))          # (FEAT_PAD, WIDTH)

    w2p = _block_diag([w2[a] for a in range(N_PSEUDO)]) * inv_hid  # (WIDTH, WIDTH)
    w3p = _block_diag([w3[a] for a in range(N_PSEUDO)]) * inv_hid  # (WIDTH, WIDTH)

    w4r = jnp.concatenate([w4[a, :, 0] for a in range(N_PSEUDO)], axis=0)
    w4r = (w4r * (inv_hid / math.sqrt(N_PSEUDO))).reshape(1, WIDTH)

    return (w1p.astype(MATMUL_DTYPE), w2p.astype(MATMUL_DTYPE),
            w3p.astype(MATMUL_DTYPE), w4r.astype(jnp.float32))


# ----------------------------------------------------------------------------
# Forward pass: Pallas atomic energies -> per-structure index_add
# ----------------------------------------------------------------------------
@functools.partial(jax.jit, static_argnames=("n_structures",))
def forward(feats, one_hot, structure_indices, n_structures, comb, packed,
            average_number_of_atoms):
    w1p, w2p, w3p, w4r = packed
    n_atoms = feats.shape[0]
    n_pad = -(-n_atoms // TM) * TM

    # Zero-pad atoms to a TM multiple and features to a full lane width.
    feats_p = jnp.zeros((n_pad, FEAT_PAD), jnp.float32).at[:n_atoms, :N_FEAT].set(feats)

    # pseudo_species_weights = combination_matrix(one_hot): normalized Linear, no bias.
    pw = (one_hot @ comb) * (1.0 / math.sqrt(N_SPECIES))           # (n_atoms, N_PSEUDO)
    pw_rep = jnp.repeat(pw, NUM_HIDDEN, axis=1)                    # (n_atoms, WIDTH)
    pw_rep = jnp.zeros((n_pad, WIDTH), jnp.float32).at[:n_atoms].set(pw_rep)

    atomic = _atomic_energies_pallas(feats_p, pw_rep, w1p, w2p, w3p, w4r)[:n_atoms]

    # energies.index_add_(0, structure_indices, atomic_energies)  (padded rows excluded)
    energies = jnp.zeros((n_structures,), jnp.float32).at[structure_indices].add(atomic)
    return energies / average_number_of_atoms


# ----------------------------------------------------------------------------
# References for correctness checks
# ----------------------------------------------------------------------------
def fused_reference_atomic(feats, pw_rep, w1p, w2p, w3p, w4r):
    """Plain-JAX mirror of the kernel math (same fusion, scaling and bf16 casts)."""
    mean = jnp.sum(feats, axis=-1, keepdims=True) / N_FEAT
    xc = feats - mean
    var = jnp.sum(xc * xc, axis=-1, keepdims=True) / N_FEAT
    xn = xc * jax.lax.rsqrt(var + LN_EPS)
    xn = jnp.pad(xn, ((0, 0), (0, FEAT_PAD - N_FEAT)))
    h = jnp.dot(xn.astype(MATMUL_DTYPE), w1p, preferred_element_type=jnp.float32)
    h = _silu(h * pw_rep) * SILU_SCALE
    h = jnp.dot(h.astype(MATMUL_DTYPE), w2p, preferred_element_type=jnp.float32)
    h = _silu(h) * SILU_SCALE
    h = jnp.dot(h.astype(MATMUL_DTYPE), w3p, preferred_element_type=jnp.float32)
    h = _silu(h) * SILU_SCALE
    return jnp.sum(h * w4r, axis=-1)


def reference_forward(feats, one_hot, structure_indices, n_structures, raw_params,
                      average_number_of_atoms):
    """Pure-f32 reference mirroring the PyTorch module semantics (unfused)."""
    comb, w1, w2, w3, w4 = raw_params
    mean = jnp.mean(feats, axis=-1, keepdims=True)
    xc = feats - mean
    var = jnp.mean(xc * xc, axis=-1, keepdims=True)
    xn = xc / jnp.sqrt(var)
    pw = (one_hot @ comb) / math.sqrt(N_SPECIES)
    atomic = jnp.zeros((feats.shape[0],), jnp.float32)
    for alpha in range(N_PSEUDO):
        xa = xn * pw[:, alpha:alpha + 1]
        h = _silu(xa @ w1[alpha] / math.sqrt(N_FEAT)) * SILU_SCALE
        h = _silu(h @ w2[alpha] / math.sqrt(NUM_HIDDEN)) * SILU_SCALE
        h = _silu(h @ w3[alpha] / math.sqrt(NUM_HIDDEN)) * SILU_SCALE
        atomic = atomic + (h @ w4[alpha] / math.sqrt(NUM_HIDDEN))[:, 0]
    atomic = atomic / math.sqrt(N_PSEUDO)
    energies = jnp.zeros((n_structures,), jnp.float32).at[structure_indices].add(atomic)
    return energies / average_number_of_atoms


# ----------------------------------------------------------------------------
# Main
# ----------------------------------------------------------------------------
if __name__ == "__main__":
    key = jax.random.PRNGKey(0)
    k_feat, k_comb, k_w1, k_w2, k_w3, k_w4, k_struct = jax.random.split(key, 7)

    n_atoms = 200
    n_structures = 4
    average_number_of_atoms = n_atoms / n_structures

    # Synthetic power-spectrum block values (stand-in for the torch_spex
    # SphericalExpansion + PowerSpectrum calculators).
    feats = jax.random.normal(k_feat, (n_atoms, N_FEAT), dtype=jnp.float32)

    # Deterministic species assignment -> one_hot(center_type)
    species_idx = jnp.arange(n_atoms, dtype=jnp.int32) % N_SPECIES
    one_hot = jax.nn.one_hot(species_idx, N_SPECIES, dtype=jnp.float32)

    # Raw weights (normalized-linear convention: 1/sqrt(fan_in) applied separately).
    comb = jax.random.normal(k_comb, (N_SPECIES, N_PSEUDO), dtype=jnp.float32)
    w1 = jax.random.normal(k_w1, (N_PSEUDO, N_FEAT, NUM_HIDDEN), dtype=jnp.float32)
    w2 = jax.random.normal(k_w2, (N_PSEUDO, NUM_HIDDEN, NUM_HIDDEN), dtype=jnp.float32)
    w3 = jax.random.normal(k_w3, (N_PSEUDO, NUM_HIDDEN, NUM_HIDDEN), dtype=jnp.float32)
    w4 = jax.random.normal(k_w4, (N_PSEUDO, NUM_HIDDEN, 1), dtype=jnp.float32)
    packed = pack_params(w1, w2, w3, w4)

    # Atom -> structure mapping (block.samples['structure'])
    structure_indices = jnp.sort(
        jax.random.randint(k_struct, (n_atoms,), 0, n_structures, dtype=jnp.int32))

    energies = forward(feats, one_hot, structure_indices, n_structures, comb, packed,
                       average_number_of_atoms)
    energies = jax.block_until_ready(energies)
    assert energies.shape == (n_structures,)
    assert bool(jnp.all(jnp.isfinite(energies)))

    # Check 1 (tight): kernel vs a plain-JAX mirror of the same fused/bf16 math.
    pw = (one_hot @ comb) * (1.0 / math.sqrt(N_SPECIES))
    pw_rep = jnp.repeat(pw, NUM_HIDDEN, axis=1)
    atomic_ref = fused_reference_atomic(feats, pw_rep, *packed)
    ref1 = (jnp.zeros((n_structures,), jnp.float32)
            .at[structure_indices].add(atomic_ref)) / average_number_of_atoms
    assert jnp.allclose(energies, ref1, rtol=1e-3, atol=1e-3), (energies, ref1)

    # Check 2 (loose): kernel (bf16 matmuls) vs the pure-f32 torch-semantics reference.
    ref2 = reference_forward(feats, one_hot, structure_indices, n_structures,
                             (comb, w1, w2, w3, w4), average_number_of_atoms)
    assert jnp.allclose(energies, ref2, rtol=5e-2, atol=5e-2), (energies, ref2)

    print("KERNEL_OK")
</pallas_src>

<mosaic_0001>
module attributes {stable_mosaic.version = 11 : i64} {
  func.func private @main(%arg0: i32) attributes {dimension_semantics = [#tpu.dimension_semantics<core_parallel>], iteration_bounds = array<i64: 2>, tpu.core_type = #tpu.core_type<sc_scalar_subcore>, window_params = []} {
    return
  }
}

module attributes {stable_mosaic.version = 11 : i64} {
  func.func private @main(%arg0: i32) attributes {dimension_semantics = [#tpu.dimension_semantics<core_parallel>], iteration_bounds = array<i64: 2>, tpu.core_type = #tpu.core_type<sc_scalar_subcore>, window_params = []} {
    return
  }
}

module attributes {stable_mosaic.version = 11 : i64} {
  func.func @_alchemical_kernel(%arg0: i32, %arg1: memref<128x128xf32, #tpu.memory_space<vmem>>, %arg2: memref<128x128xf32, #tpu.memory_space<vmem>>, %arg3: memref<128x128xbf16, #tpu.memory_space<vmem>>, %arg4: memref<128x128xbf16, #tpu.memory_space<vmem>>, %arg5: memref<128x128xbf16, #tpu.memory_space<vmem>>, %arg6: memref<1x128xf32, #tpu.memory_space<vmem>>, %arg7: memref<128x128xf32, #tpu.memory_space<vmem>>) attributes {dimension_semantics = [#tpu.dimension_semantics<parallel>], iteration_bounds = array<i64: 2>, scalar_prefetch = 0 : i64, scratch_operands = 0 : i64, tpu.core_type = #tpu.core_type<tc>, window_params = [{transform_indices = @transform_0, window_bounds = array<i64: 128, 128>}, {transform_indices = @transform_1, window_bounds = array<i64: 128, 128>}, {pipeline_mode = #tpu.pipeline_mode<synchronous>, transform_indices = @transform_2, window_bounds = array<i64: 128, 128>}, {pipeline_mode = #tpu.pipeline_mode<synchronous>, transform_indices = @transform_3, window_bounds = array<i64: 128, 128>}, {pipeline_mode = #tpu.pipeline_mode<synchronous>, transform_indices = @transform_4, window_bounds = array<i64: 128, 128>}, {pipeline_mode = #tpu.pipeline_mode<synchronous>, transform_indices = @transform_5, window_bounds = array<i64: 1, 128>}, {transform_indices = @transform_6, window_bounds = array<i64: 128, 128>}]} {
    %c0 = arith.constant 0 : index
    %c0_0 = arith.constant 0 : index
    %0 = vector.load %arg1[%c0, %c0_0] : memref<128x128xf32, #tpu.memory_space<vmem>>, vector<128x128xf32>
    %1 = tpu.iota {dimensions = array<i32: 1>} : vector<128x128xi32>
    %c80_i32 = arith.constant 80 : i32
    %2 = vector.broadcast %c80_i32 : i32 to vector<128x128xi32>
    %3 = arith.cmpi slt, %1, %2 : vector<128x128xi32>
    %cst = arith.constant dense<0.000000e+00> : vector<128xf32>
    %4 = vector.multi_reduction <add>, %0, %cst [1] : vector<128x128xf32> to vector<128xf32>
    %5 = vector.shape_cast %4 : vector<128xf32> to vector<128x1xf32>
    %cst_1 = arith.constant 1.250000e-02 : f32
    %6 = vector.broadcast %cst_1 : f32 to vector<128x1xf32>
    %7 = arith.mulf %5, %6 : vector<128x1xf32>
    %8 = vector.broadcast %7 : vector<128x1xf32> to vector<128x128xf32>
    %9 = arith.subf %0, %8 : vector<128x128xf32>
    %cst_2 = arith.constant 0.000000e+00 : f32
    %10 = vector.broadcast %cst_2 : f32 to vector<128x128xf32>
    %11 = arith.select %3, %9, %10 : vector<128x128xi1>, vector<128x128xf32>
    %12 = arith.mulf %11, %11 : vector<128x128xf32>
    %cst_3 = arith.constant dense<0.000000e+00> : vector<128xf32>
    %13 = vector.multi_reduction <add>, %12, %cst_3 [1] : vector<128x128xf32> to vector<128xf32>
    %14 = vector.shape_cast %13 : vector<128xf32> to vector<128x1xf32>
    %cst_4 = arith.constant 1.250000e-02 : f32
    %15 = vector.broadcast %cst_4 : f32 to vector<128x1xf32>
    %16 = arith.mulf %14, %15 : vector<128x1xf32>
    %cst_5 = arith.constant 1.000000e-30 : f32
    %17 = vector.broadcast %cst_5 : f32 to vector<128x1xf32>
    %18 = arith.addf %16, %17 : vector<128x1xf32>
    %19 = math.rsqrt %18 : vector<128x1xf32>
    %20 = vector.broadcast %19 : vector<128x1xf32> to vector<128x128xf32>
    %21 = arith.mulf %11, %20 : vector<128x128xf32>
    %22 = arith.truncf %21 : vector<128x128xf32> to vector<128x128xbf16>
    %c0_6 = arith.constant 0 : index
    %c0_7 = arith.constant 0 : index
    %23 = vector.load %arg3[%c0_6, %c0_7] : memref<128x128xbf16, #tpu.memory_space<vmem>>, vector<128x128xbf16>
    %cst_8 = arith.constant dense<0.000000e+00> : vector<128x128xf32>
    %24 = tpu.matmul %22, %23, %cst_8 {dimension_numbers = #tpu.dot_dimension_numbers<[1], [0], [0], [1], [0, 0, 1, 1], [], []>} : vector<128x128xbf16>, vector<128x128xbf16>, vector<128x128xf32> -> vector<128x128xf32>
    %c0_9 = arith.constant 0 : index
    %c0_10 = arith.constant 0 : index
    %25 = vector.load %arg2[%c0_9, %c0_10] : memref<128x128xf32, #tpu.memory_space<vmem>>, vector<128x128xf32>
    %26 = arith.mulf %24, %25 : vector<128x128xf32>
    %27 = arith.negf %26 : vector<128x128xf32>
    %28 = math.exp %27 : vector<128x128xf32>
    %cst_11 = arith.constant 1.000000e+00 : f32
    %29 = vector.broadcast %cst_11 : f32 to vector<128x128xf32>
    %30 = arith.addf %29, %28 : vector<128x128xf32>
    %31 = arith.divf %29, %30 : vector<128x128xf32>
    %32 = arith.mulf %26, %31 : vector<128x128xf32>
    %cst_12 = arith.constant 1.676500e+00 : f32
    %33 = vector.broadcast %cst_12 : f32 to vector<128x128xf32>
    %34 = arith.mulf %32, %33 : vector<128x128xf32>
    %35 = arith.truncf %34 : vector<128x128xf32> to vector<128x128xbf16>
    %c0_13 = arith.constant 0 : index
    %c0_14 = arith.constant 0 : index
    %36 = vector.load %arg4[%c0_13, %c0_14] : memref<128x128xbf16, #tpu.memory_space<vmem>>, vector<128x128xbf16>
    %cst_15 = arith.constant dense<0.000000e+00> : vector<128x128xf32>
    %37 = tpu.matmul %35, %36, %cst_15 {dimension_numbers = #tpu.dot_dimension_numbers<[1], [0], [0], [1], [0, 0, 1, 1], [], []>} : vector<128x128xbf16>, vector<128x128xbf16>, vector<128x128xf32> -> vector<128x128xf32>
    %38 = arith.negf %37 : vector<128x128xf32>
    %39 = math.exp %38 : vector<128x128xf32>
    %cst_16 = arith.constant 1.000000e+00 : f32
    %40 = vector.broadcast %cst_16 : f32 to vector<128x128xf32>
    %41 = arith.addf %40, %39 : vector<128x128xf32>
    %42 = arith.divf %40, %41 : vector<128x128xf32>
    %43 = arith.mulf %37, %42 : vector<128x128xf32>
    %cst_17 = arith.constant 1.676500e+00 : f32
    %44 = vector.broadcast %cst_17 : f32 to vector<128x128xf32>
    %45 = arith.mulf %43, %44 : vector<128x128xf32>
    %46 = arith.truncf %45 : vector<128x128xf32> to vector<128x128xbf16>
    %c0_18 = arith.constant 0 : index
    %c0_19 = arith.constant 0 : index
    %47 = vector.load %arg5[%c0_18, %c0_19] : memref<128x128xbf16, #tpu.memory_space<vmem>>, vector<128x128xbf16>
    %cst_20 = arith.constant dense<0.000000e+00> : vector<128x128xf32>
    %48 = tpu.matmul %46, %47, %cst_20 {dimension_numbers = #tpu.dot_dimension_numbers<[1], [0], [0], [1], [0, 0, 1, 1], [], []>} : vector<128x128xbf16>, vector<128x128xbf16>, vector<128x128xf32> -> vector<128x128xf32>
    %49 = arith.negf %48 : vector<128x128xf32>
    %50 = math.exp %49 : vector<128x128xf32>
    %cst_21 = arith.constant 1.000000e+00 : f32
    %51 = vector.broadcast %cst_21 : f32 to vector<128x128xf32>
    %52 = arith.addf %51, %50 : vector<128x128xf32>
    %53 = arith.divf %51, %52 : vector<128x128xf32>
    %54 = arith.mulf %48, %53 : vector<128x128xf32>
    %cst_22 = arith.constant 1.676500e+00 : f32
    %55 = vector.broadcast %cst_22 : f32 to vector<128x128xf32>
    %56 = arith.mulf %54, %55 : vector<128x128xf32>
    %c0_23 = arith.constant 0 : index
    %c0_24 = arith.constant 0 : index
    %57 = vector.load %arg6[%c0_23, %c0_24] : memref<1x128xf32, #tpu.memory_space<vmem>>, vector<1x128xf32>
    %58 = vector.broadcast %57 : vector<1x128xf32> to vector<128x128xf32>
    %59 = arith.mulf %56, %58 : vector<128x128xf32>
    %cst_25 = arith.constant dense<0.000000e+00> : vector<128xf32>
    %60 = vector.multi_reduction <add>, %59, %cst_25 [1] : vector<128x128xf32> to vector<128xf32>
    %61 = vector.shape_cast %60 : vector<128xf32> to vector<128x1xf32>
    %62 = vector.shape_cast %61 : vector<128x1xf32> to vector<128x1xf32>
    %63 = vector.broadcast %62 : vector<128x1xf32> to vector<128x128xf32>
    %c0_26 = arith.constant 0 : index
    %c0_27 = arith.constant 0 : index
    %64 = vector.load %arg7[%c0_26, %c0_27] : memref<128x128xf32, #tpu.memory_space<vmem>>, vector<128x128xf32>
    tpu.vector_store %arg7[%c0_26, %c0_27], %63 {strides = array<i32>} : memref<128x128xf32, #tpu.memory_space<vmem>>, vector<128x128xf32>,
    return
  }
  func.func @transform_0(%arg0: i32) -> (i32, i32) {
    %c0_i32 = arith.constant 0 : i32
    %c0_i32_0 = arith.constant 0 : i32
    return %arg0, %c0_i32 : i32, i32
  }
  func.func @transform_1(%arg0: i32) -> (i32, i32) {
    %c0_i32 = arith.constant 0 : i32
    %c0_i32_0 = arith.constant 0 : i32
    return %arg0, %c0_i32 : i32, i32
  }
  func.func @transform_2(%arg0: i32) -> (i32, i32) {
    %c0_i32 = arith.constant 0 : i32
    %c0_i32_0 = arith.constant 0 : i32
    %c0_i32_1 = arith.constant 0 : i32
    return %c0_i32, %c0_i32_0 : i32, i32
  }
  func.func @transform_3(%arg0: i32) -> (i32, i32) {
    %c0_i32 = arith.constant 0 : i32
    %c0_i32_0 = arith.constant 0 : i32
    %c0_i32_1 = arith.constant 0 : i32
    return %c0_i32, %c0_i32_0 : i32, i32
  }
  func.func @transform_4(%arg0: i32) -> (i32, i32) {
    %c0_i32 = arith.constant 0 : i32
    %c0_i32_0 = arith.constant 0 : i32
    %c0_i32_1 = arith.constant 0 : i32
    return %c0_i32, %c0_i32_0 : i32, i32
  }
  func.func @transform_5(%arg0: i32) -> (i32, i32) {
    %c0_i32 = arith.constant 0 : i32
    %c0_i32_0 = arith.constant 0 : i32
    %c0_i32_1 = arith.constant 0 : i32
    return %c0_i32, %c0_i32_0 : i32, i32
  }
  func.func @transform_6(%arg0: i32) -> (i32, i32) {
    %c0_i32 = arith.constant 0 : i32
    %c0_i32_0 = arith.constant 0 : i32
    return %arg0, %c0_i32 : i32, i32
  }
}

</mosaic_0001>

<llo_original>
// kernel: forward.1
$region0: #{forward.1}
  #allocation0 [shape = 'u32[]', space=smem, size = 0x4, offset = 0x4, fixed_abs, tag = 'smem constant byte address 0x4 - core index']
  #allocation1 [shape = 'u32[144,128]{1,0:T(1,128)}', space=vmem, size = 0x12000, scoped, tag = 'internal scratch']
  %s0 = inlined_call_operand.vmem [shape: f32[256,128], index: 0, kind: input, shape index: {}]
  %s1 = inlined_call_operand.vmem [shape: f32[256,128], index: 1, kind: input, shape index: {}]
  %s2 = inlined_call_operand.vmem [shape: bf16[128,128], index: 2, kind: input, shape index: {}]
  %s3 = inlined_call_operand.vmem [shape: bf16[128,128], index: 3, kind: input, shape index: {}]
  %s4 = inlined_call_operand.vmem [shape: bf16[128,128], index: 4, kind: input, shape index: {}]
  %s5 = inlined_call_operand.vmem [shape: f32[1,128], index: 5, kind: input, shape index: {}]
  %s6 = inlined_call_operand.vmem [shape: f32[256,128], index: 6, kind: output, shape index: {}]
  %s7 = sld [smem:[#allocation0]]
  $region57: #{forward.1} parent=0
    _
  %s9 = ssub.s32 1, %s7
  %s10 = scalar_select 0, %s9, %s7
  loop: start=0, step=1, limit=4
  $region2: #{forward.1} parent=0 // loop_pre_header
    _
  $region3: #{forward.1} parent=0 // loop_header
    %s12 = sphi 0, %s16
    %p13 = scmp.ge.s32.totalorder %s12, 4
    %s22 = sphi 0, %s24
    %s25 = sphi 0, %s22
    %s26 = sphi 0, %s25
    %s42 = sphi 0, %s26
    %s48 = sphi 0, %s50
    %s51 = sphi 0, %s48
    %s52 = sphi 0, %s51
    %s68 = sphi 0, %s52
    %s72 = sphi 0, %s72
    %s74 = sphi 0, %s72
    %s75 = sphi 0, %s74
    %s89 = sphi 0, %s75
    %s93 = sphi 0, %s93
    %s95 = sphi 0, %s93
    %s96 = sphi 0, %s95
    %s110 = sphi 0, %s96
    %s114 = sphi 0, %s114
    %s116 = sphi 0, %s114
    %s117 = sphi 0, %s116
    %s131 = sphi 0, %s117
    %s135 = sphi 0, %s135
    %s137 = sphi 0, %s135
    %s138 = sphi 0, %s137
    %s152 = sphi 0, %s138
    %s158 = sphi 0, %s160
    %s161 = sphi 0, %s158
    %s162 = sphi 0, %s161
    %s178 = sphi 0, %s162
  $region4: #{forward.1} parent=0 // loop_header_branch
    %15 = sbr.rel (%p13) target = $region8
  $region5: #{forward.1} parent=0 // loop_body
    %s17 = ssub.s32 %s12, 1
    %s18 = ssub.s32 %s12, 2
    %s19 = sadd.s32 %s12, 1
    %s20 = ssub.s32 %s12, %s19
    %p21 = scmp.eq.s32.totalorder %s20, 0
    %s23 = sadd.s32 %s22, 1
    %s24 = scalar_select %p21, %s22, %s23
    %p27 = pneg %p21
    %p28 = scmp.eq.s32.totalorder %s12, 1
    %p29 = por %p27, %p28
    %p30 = scmp.ne.s32.totalorder %s22, %s25
    %p31 = scmp.eq.s32.totalorder %s12, 0
    %p32 = por %p30, %p31
    %p33 = scmp.ne.s32.totalorder %s22, %s25
    %p34 = scmp.eq.s32.totalorder %s17, 1
    %p35 = por %p33, %p34
    %p36 = scmp.ne.s32.totalorder %s25, %s26
    %p37 = scmp.eq.s32.totalorder %s17, 0
    %p38 = por %p36, %p37
    %p39 = scmp.ne.s32.totalorder %s25, %s26
    %p40 = scmp.eq.s32.totalorder %s18, 1
    %p41 = por %p39, %p40
    %p43 = scmp.ne.s32.totalorder %s26, %s42
    %p44 = scmp.eq.s32.totalorder %s18, 0
    %p45 = por %p43, %p44
    %s46 = ssub.s32 %s12, %s19
    %p47 = scmp.eq.s32.totalorder %s46, 0
    %s49 = sadd.s32 %s48, 1
    %s50 = scalar_select %p47, %s48, %s49
    %p53 = pneg %p47
    %p54 = scmp.eq.s32.totalorder %s12, 1
    %p55 = por %p53, %p54
    %p56 = scmp.ne.s32.totalorder %s48, %s51
    %p57 = scmp.eq.s32.totalorder %s12, 0
    %p58 = por %p56, %p57
    %p59 = scmp.ne.s32.totalorder %s48, %s51
    %p60 = scmp.eq.s32.totalorder %s17, 1
    %p61 = por %p59, %p60
    %p62 = scmp.ne.s32.totalorder %s51, %s52
    %p63 = scmp.eq.s32.totalorder %s17, 0
    %p64 = por %p62, %p63
    %p65 = scmp.ne.s32.totalorder %s51, %s52
    %p66 = scmp.eq.s32.totalorder %s18, 1
    %p67 = por %p65, %p66
    %p69 = scmp.ne.s32.totalorder %s52, %s68
    %p70 = scmp.eq.s32.totalorder %s18, 0
    %p71 = por %p69, %p70
    %s73 = sadd.s32 %s72, 1
    %p76 = scmp.eq.s32.totalorder %s12, 1
    %p77 = scmp.ne.s32.totalorder %s72, %s74
    %p78 = scmp.eq.s32.totalorder %s12, 0
    %p79 = por %p77, %p78
    %p80 = scmp.ne.s32.totalorder %s72, %s74
    %p81 = scmp.eq.s32.totalorder %s17, 1
    %p82 = por %p80, %p81
    %p83 = scmp.ne.s32.totalorder %s74, %s75
    %p84 = scmp.eq.s32.totalorder %s17, 0
    %p85 = por %p83, %p84
    %p86 = scmp.ne.s32.totalorder %s74, %s75
    %p87 = scmp.eq.s32.totalorder %s18, 1
    %p88 = por %p86, %p87
    %p90 = scmp.ne.s32.totalorder %s75, %s89
    %p91 = scmp.eq.s32.totalorder %s18, 0
    %p92 = por %p90, %p91
    %s94 = sadd.s32 %s93, 1
    %p97 = scmp.eq.s32.totalorder %s12, 1
    %p98 = scmp.ne.s32.totalorder %s93, %s95
    %p99 = scmp.eq.s32.totalorder %s12, 0
    %p100 = por %p98, %p99
    %p101 = scmp.ne.s32.totalorder %s93, %s95
    %p102 = scmp.eq.s32.totalorder %s17, 1
    %p103 = por %p101, %p102
    %p104 = scmp.ne.s32.totalorder %s95, %s96
    %p105 = scmp.eq.s32.totalorder %s17, 0
    %p106 = por %p104, %p105
    %p107 = scmp.ne.s32.totalorder %s95, %s96
    %p108 = scmp.eq.s32.totalorder %s18, 1
    %p109 = por %p107, %p108
    %p111 = scmp.ne.s32.totalorder %s96, %s110
    %p112 = scmp.eq.s32.totalorder %s18, 0
    %p113 = por %p111, %p112
    %s115 = sadd.s32 %s114, 1
    %p118 = scmp.eq.s32.totalorder %s12, 1
    %p119 = scmp.ne.s32.totalorder %s114, %s116
    %p120 = scmp.eq.s32.totalorder %s12, 0
    %p121 = por %p119, %p120
    %p122 = scmp.ne.s32.totalorder %s114, %s116
    %p123 = scmp.eq.s32.totalorder %s17, 1
    %p124 = por %p122, %p123
    %p125 = scmp.ne.s32.totalorder %s116, %s117
    %p126 = scmp.eq.s32.totalorder %s17, 0
    %p127 = por %p125, %p126
    %p128 = scmp.ne.s32.totalorder %s116, %s117
    %p129 = scmp.eq.s32.totalorder %s18, 1
    %p130 = por %p128, %p129
    %p132 = scmp.ne.s32.totalorder %s117, %s131
    %p133 = scmp.eq.s32.totalorder %s18, 0
    %p134 = por %p132, %p133
    %s136 = sadd.s32 %s135, 1
    %p139 = scmp.eq.s32.totalorder %s12, 1
    %p140 = scmp.ne.s32.totalorder %s135, %s137
    %p141 = scmp.eq.s32.totalorder %s12, 0
    %p142 = por %p140, %p141
    %p143 = scmp.ne.s32.totalorder %s135, %s137
    %p144 = scmp.eq.s32.totalorder %s17, 1
    %p145 = por %p143, %p144
    %p146 = scmp.ne.s32.totalorder %s137, %s138
    %p147 = scmp.eq.s32.totalorder %s17, 0
    %p148 = por %p146, %p147
    %p149 = scmp.ne.s32.totalorder %s137, %s138
    %p150 = scmp.eq.s32.totalorder %s18, 1
    %p151 = por %p149, %p150
    %p153 = scmp.ne.s32.totalorder %s138, %s152
    %p154 = scmp.eq.s32.totalorder %s18, 0
    %p155 = por %p153, %p154
    %s156 = ssub.s32 %s12, %s19
    %p157 = scmp.eq.s32.totalorder %s156, 0
    %s159 = sadd.s32 %s158, 1
    %s160 = scalar_select %p157, %s158, %s159
    %p163 = pneg %p157
    %p164 = scmp.eq.s32.totalorder %s12, 1
    %p165 = por %p163, %p164
    %p166 = scmp.ne.s32.totalorder %s158, %s161
    %p167 = scmp.eq.s32.totalorder %s12, 0
    %p168 = por %p166, %p167
    %p169 = scmp.ne.s32.totalorder %s158, %s161
    %p170 = scmp.eq.s32.totalorder %s17, 1
    %p171 = por %p169, %p170
    %p172 = scmp.ne.s32.totalorder %s161, %s162
    %p173 = scmp.eq.s32.totalorder %s17, 0
    %p174 = por %p172, %p173
    %p175 = scmp.ne.s32.totalorder %s161, %s162
    %p176 = scmp.eq.s32.totalorder %s18, 1
    %p177 = por %p175, %p176
    %p179 = scmp.ne.s32.totalorder %s162, %s178
    %p180 = scmp.eq.s32.totalorder %s18, 0
    %p181 = por %p179, %p180
    %p182 = scmp.le.s32.totalorder 1, %s12
    %p183 = scmp.lt.s32.totalorder %s12, 3
    %p184 = pnand %p182, %p183
    %p185 = pneg %p184
    // Predicated region
    $region9: #{forward.1} parent=5 // pred_check
      _
    $region10: #{forward.1} parent=5 // pred_check_branch
      %187 = sbr.rel (%p184) target = $region12
    $region11: #{forward.1} parent=5 // pred_region
      %s188 = ssub.s32 %s12, 1
      // Predicated region
      $region13: #{forward.1} parent=11 // pred_check
        %p189 = pneg %p85
      $region14: #{forward.1} parent=11 // pred_check_branch
        %191 = sbr.rel (%p189) target = $region16
      $region15: #{forward.1} parent=11 // pred_region
        _
      $region16: #{forward.1} parent=11 // pred_fallthru
        _
      // Predicated region
      $region17: #{forward.1} parent=11 // pred_check
        %p192 = pneg %p106
      $region18: #{forward.1} parent=11 // pred_check_branch
        %194 = sbr.rel (%p192) target = $region20
      $region19: #{forward.1} parent=11 // pred_region
        _
      $region20: #{forward.1} parent=11 // pred_fallthru
        _
      // Predicated region
      $region21: #{forward.1} parent=11 // pred_check
        %p195 = pneg %p127
      $region22: #{forward.1} parent=11 // pred_check_branch
        %197 = sbr.rel (%p195) target = $region24
      $region23: #{forward.1} parent=11 // pred_region
        _
      $region24: #{forward.1} parent=11 // pred_fallthru
        _
      // Predicated region
      $region25: #{forward.1} parent=11 // pred_check
        %p198 = pneg %p148
      $region26: #{forward.1} parent=11 // pred_check_branch
        %200 = sbr.rel (%p198) target = $region28
      $region27: #{forward.1} parent=11 // pred_region
        _
      $region28: #{forward.1} parent=11 // pred_fallthru
        _
    $region12: #{forward.1} parent=5 // pred_fallthru
      _
    %p201 = scmp.lt.s32.totalorder %s12, 2
    // Predicated region
    $region29: #{forward.1} parent=5 // pred_check
      %p202 = pneg %p201
    $region30: #{forward.1} parent=5 // pred_check_branch
      %204 = sbr.rel (%p202) target = $region32
    $region31: #{forward.1} parent=5 // pred_region
      // Predicated region
      $region33: #{forward.1} parent=31 // pred_check
        %p205 = pneg %p32
      $region34: #{forward.1} parent=31 // pred_check_branch
        %207 = sbr.rel (%p205) target = $region36
      $region35: #{forward.1} parent=31 // pred_region
        %s208 = smul.u32 16, %s12
        %p209 = scmp.lt.s32.totalorder %s208, 31
        %s210 = scalar_select %p209, %s208, 31
        %s211 = smul.addr %s210, 8
        %s212 = scalar_lea.vmem %s0, %s211
        %s213 = smul.u32 16, %s12
      $region36: #{forward.1} parent=31 // pred_fallthru
        _
      // Predicated region
      $region37: #{forward.1} parent=31 // pred_check
        %p214 = pneg %p58
      $region38: #{forward.1} parent=31 // pred_check_branch
        %216 = sbr.rel (%p214) target = $region40
      $region39: #{forward.1} parent=31 // pred_region
        %s217 = smul.u32 16, %s12
        %p218 = scmp.lt.s32.totalorder %s217, 31
        %s219 = scalar_select %p218, %s217, 31
        %s220 = smul.addr %s219, 8
        %s221 = scalar_lea.vmem %s1, %s220
        %s222 = smul.u32 16, %s12
      $region40: #{forward.1} parent=31 // pred_fallthru
        _
    $region32: #{forward.1} parent=5 // pred_fallthru
      _
    %p223 = scmp.le.s32.totalorder 1, %s12
    %p224 = scmp.lt.s32.totalorder %s12, 3
    %p225 = pnand %p223, %p224
    %p226 = pneg %p225
    // Predicated region
    $region41: #{forward.1} parent=5 // pred_check
      _
    $region42: #{forward.1} parent=5 // pred_check_branch
      %228 = sbr.rel (%p225) target = $region44
    $region43: #{forward.1} parent=5 // pred_region
      %s229 = ssub.s32 %s12, 1
      %s230 = smul.u32 16, %s17
      %p231 = scmp.lt.s32.totalorder %s230, 31
      %s232 = scalar_select %p231, %s230, 31
      %s233 = smul.addr %s232, 8
      %s234 = scalar_lea.vmem %s0, %s233
      %p235 = pneg %p38
      %p236 = pneg %p35
      %s237 = smul.u32 16, %s17
      %p238 = scmp.lt.s32.totalorder %s237, 31
      %s239 = scalar_select %p238, %s237, 31
      %s240 = smul.addr %s239, 8
      %s241 = scalar_lea.vmem %s1, %s240
      %p242 = pneg %p64
      %p243 = pneg %p61
      %p244 = pneg %p85
      %p245 = pneg %p82
      %p246 = pneg %p106
      %p247 = pneg %p103
      %p248 = pneg %p127
      %p249 = pneg %p124
      %p250 = pneg %p148
      %p251 = pneg %p145
      %p252 = pneg %p174
      %p253 = pneg %p171
      %s254 = smul.u32 16, %s17
      %p255 = scmp.lt.s32.totalorder %s254, 31
      %s256 = scalar_select %p255, %s254, 31
      %s257 = smul.addr %s256, 8
      %s258 = scalar_lea.vmem %s6, %s257
      %s259 = smul.u32 16, %s17
      %p260 = scmp.lt.s32.totalorder %s259, 31
      %s261 = scalar_select %p260, %s259, 31
      %s262 = smul.addr %s261, 8
      %s263 = scalar_lea.vmem %s0, %s262
      %s264 = smul.u32 16, %s17
      %s265 = smul.u32 16, %s17
      %p266 = scmp.lt.s32.totalorder %s265, 31
      %s267 = scalar_select %p266, %s265, 31
      %s268 = smul.addr %s267, 8
      %s269 = scalar_lea.vmem %s1, %s268
      %s270 = smul.u32 16, %s17
      %s271 = smul.u32 16, %s17
      %p272 = scmp.lt.s32.totalorder %s271, 31
      %s273 = scalar_select %p272, %s271, 31
      %s274 = smul.addr %s273, 8
      %s275 = scalar_lea.vmem %s6, %s274
      %s276 = smul.u32 16, %s17
      %v278 = vld [vmem:[%s263] sm:$0xff]
      %v279 = vld [vmem:[%s263 + $0x8] sm:$0xff]
      %v280 = vld [vmem:[%s263 + $0x10] sm:$0xff]
      %v281 = vld [vmem:[%s263 + $0x18] sm:$0xff]
      %v282 = vld [vmem:[%s263 + $0x20] sm:$0xff]
      %v283 = vld [vmem:[%s263 + $0x28] sm:$0xff]
      %v284 = vld [vmem:[%s263 + $0x30] sm:$0xff]
      %v285 = vld [vmem:[%s263 + $0x38] sm:$0xff]
      %v286 = vld [vmem:[%s263 + $0x40] sm:$0xff]
      %v287 = vld [vmem:[%s263 + $0x48] sm:$0xff]
      %v288 = vld [vmem:[%s263 + $0x50] sm:$0xff]
      %v289 = vld [vmem:[%s263 + $0x58] sm:$0xff]
      %v290 = vld [vmem:[%s263 + $0x60] sm:$0xff]
      %v291 = vld [vmem:[%s263 + $0x68] sm:$0xff]
      %v292 = vld [vmem:[%s263 + $0x70] sm:$0xff]
      %v293 = vld [vmem:[%s263 + $0x78] sm:$0xff]
      %v294 = vlaneseq
      %v295 = vand.u32 %v294, 127
      %vm296 = vcmp.lt.s32.totalorder %v295, 80
      %297 = vadd.xlane.f32.xlu0 %v278
      %v298 = vpop.xlane.xlu0 %297
      %299 = vadd.xlane.f32.xlu0 %v279
      %v300 = vpop.xlane.xlu0 %299
      %301 = vadd.xlane.f32.xlu0 %v280
      %v302 = vpop.xlane.xlu0 %301
      %303 = vadd.xlane.f32.xlu0 %v281
      %v304 = vpop.xlane.xlu0 %303
      %305 = vadd.xlane.f32.xlu0 %v282
      %v306 = vpop.xlane.xlu0 %305
      %307 = vadd.xlane.f32.xlu0 %v283
      %v308 = vpop.xlane.xlu0 %307
      %309 = vadd.xlane.f32.xlu0 %v284
      %v310 = vpop.xlane.xlu0 %309
      %311 = vadd.xlane.f32.xlu0 %v285
      %v312 = vpop.xlane.xlu0 %311
      %313 = vadd.xlane.f32.xlu0 %v286
      %v314 = vpop.xlane.xlu0 %313
      %315 = vadd.xlane.f32.xlu0 %v287
      %v316 = vpop.xlane.xlu0 %315
      %317 = vadd.xlane.f32.xlu0 %v288
      %v318 = vpop.xlane.xlu0 %317
      %319 = vadd.xlane.f32.xlu0 %v289
      %v320 = vpop.xlane.xlu0 %319
      %321 = vadd.xlane.f32.xlu0 %v290
      %v322 = vpop.xlane.xlu0 %321
      %323 = vadd.xlane.f32.xlu0 %v291
      %v324 = vpop.xlane.xlu0 %323
      %325 = vadd.xlane.f32.xlu0 %v292
      %v326 = vpop.xlane.xlu0 %325
      %327 = vadd.xlane.f32.xlu0 %v293
      %v328 = vpop.xlane.xlu0 %327
      %v329 = vmul.f32 %v298, 0.0125
      %v330 = vmul.f32 %v300, 0.0125
      %v331 = vmul.f32 %v302, 0.0125
      %v332 = vmul.f32 %v304, 0.0125
      %v333 = vmul.f32 %v306, 0.0125
      %v334 = vmul.f32 %v308, 0.0125
      %v335 = vmul.f32 %v310, 0.0125
      %v336 = vmul.f32 %v312, 0.0125
      %v337 = vmul.f32 %v314, 0.0125
      %v338 = vmul.f32 %v316, 0.0125
      %v339 = vmul.f32 %v318, 0.0125
      %v340 = vmul.f32 %v320, 0.0125
      %v341 = vmul.f32 %v322, 0.0125
      %v342 = vmul.f32 %v324, 0.0125
      %v343 = vmul.f32 %v326, 0.0125
      %v344 = vmul.f32 %v328, 0.0125
      %v345 = vsub.f32 %v278, %v329
      %v346 = vsub.f32 %v279, %v330
      %v347 = vsub.f32 %v280, %v331
      %v348 = vsub.f32 %v281, %v332
      %v349 = vsub.f32 %v282, %v333
      %v350 = vsub.f32 %v283, %v334
      %v351 = vsub.f32 %v284, %v335
      %v352 = vsub.f32 %v285, %v336
      %v353 = vsub.f32 %v286, %v337
      %v354 = vsub.f32 %v287, %v338
      %v355 = vsub.f32 %v288, %v339
      %v356 = vsub.f32 %v289, %v340
      %v357 = vsub.f32 %v290, %v341
      %v358 = vsub.f32 %v291, %v342
      %v359 = vsub.f32 %v292, %v343
      %v360 = vsub.f32 %v293, %v344
      %v361 = vsel %vm296, %v345, 0.0
      %v362 = vsel %vm296, %v346, 0.0
      %v363 = vsel %vm296, %v347, 0.0
      %v364 = vsel %vm296, %v348, 0.0
      %v365 = vsel %vm296, %v349, 0.0
      %v366 = vsel %vm296, %v350, 0.0
      %v367 = vsel %vm296, %v351, 0.0
      %v368 = vsel %vm296, %v352, 0.0
      %v369 = vsel %vm296, %v353, 0.0
      %v370 = vsel %vm296, %v354, 0.0
      %v371 = vsel %vm296, %v355, 0.0
      %v372 = vsel %vm296, %v356, 0.0
      %v373 = vsel %vm296, %v357, 0.0
      %v374 = vsel %vm296, %v358, 0.0
      %v375 = vsel %vm296, %v359, 0.0
      %v376 = vsel %vm296, %v360, 0.0
      %v377 = vmul.f32 %v361, %v361
      %v378 = vmul.f32 %v362, %v362
      %v379 = vmul.f32 %v363, %v363
      %v380 = vmul.f32 %v364, %v364
      %v381 = vmul.f32 %v365, %v365
      %v382 = vmul.f32 %v366, %v366
      %v383 = vmul.f32 %v367, %v367
      %v384 = vmul.f32 %v368, %v368
      %v385 = vmul.f32 %v369, %v369
      %v386 = vmul.f32 %v370, %v370
      %v387 = vmul.f32 %v371, %v371
      %v388 = vmul.f32 %v372, %v372
      %v389 = vmul.f32 %v373, %v373
      %v390 = vmul.f32 %v374, %v374
      %v391 = vmul.f32 %v375, %v375
      %v392 = vmul.f32 %v376, %v376
      %393 = vadd.xlane.f32.xlu0 %v377
      %v394 = vpop.xlane.xlu0 %393
      %395 = vadd.xlane.f32.xlu0 %v378
      %v396 = vpop.xlane.xlu0 %395
      %397 = vadd.xlane.f32.xlu0 %v379
      %v398 = vpop.xlane.xlu0 %397
      %399 = vadd.xlane.f32.xlu0 %v380
      %v400 = vpop.xlane.xlu0 %399
      %401 = vadd.xlane.f32.xlu0 %v381
      %v402 = vpop.xlane.xlu0 %401
      %403 = vadd.xlane.f32.xlu0 %v382
      %v404 = vpop.xlane.xlu0 %403
      %405 = vadd.xlane.f32.xlu0 %v383
      %v406 = vpop.xlane.xlu0 %405
      %407 = vadd.xlane.f32.xlu0 %v384
      %v408 = vpop.xlane.xlu0 %407
      %409 = vadd.xlane.f32.xlu0 %v385
      %v410 = vpop.xlane.xlu0 %409
      %411 = vadd.xlane.f32.xlu0 %v386
      %v412 = vpop.xlane.xlu0 %411
      %413 = vadd.xlane.f32.xlu0 %v387
      %v414 = vpop.xlane.xlu0 %413
      %415 = vadd.xlane.f32.xlu0 %v388
      %v416 = vpop.xlane.xlu0 %415
      %417 = vadd.xlane.f32.xlu0 %v389
      %v418 = vpop.xlane.xlu0 %417
      %419 = vadd.xlane.f32.xlu0 %v390
      %v420 = vpop.xlane.xlu0 %419
      %421 = vadd.xlane.f32.xlu0 %v391
      %v422 = vpop.xlane.xlu0 %421
      %423 = vadd.xlane.f32.xlu0 %v392
      %v424 = vpop.xlane.xlu0 %423
      %v425 = vmul.f32 %v394, 0.0125
      %v426 = vmul.f32 %v396, 0.0125
      %v427 = vmul.f32 %v398, 0.0125
      %v428 = vmul.f32 %v400, 0.0125
      %v429 = vmul.f32 %v402, 0.0125
      %v430 = vmul.f32 %v404, 0.0125
      %v431 = vmul.f32 %v406, 0.0125
      %v432 = vmul.f32 %v408, 0.0125
      %v433 = vmul.f32 %v410, 0.0125
      %v434 = vmul.f32 %v412, 0.0125
      %v435 = vmul.f32 %v414, 0.0125
      %v436 = vmul.f32 %v416, 0.0125
      %v437 = vmul.f32 %v418, 0.0125
      %v438 = vmul.f32 %v420, 0.0125
      %v439 = vmul.f32 %v422, 0.0125
      %v440 = vmul.f32 %v424, 0.0125
      %v441 = vadd.f32 %v425, 1e-30
      %v442 = vadd.f32 %v426, 1e-30
      %v443 = vadd.f32 %v427, 1e-30
      %v444 = vadd.f32 %v428, 1e-30
      %v445 = vadd.f32 %v429, 1e-30
      %v446 = vadd.f32 %v430, 1e-30
      %v447 = vadd.f32 %v431, 1e-30
      %v448 = vadd.f32 %v432, 1e-30
      %v449 = vadd.f32 %v433, 1e-30
      %v450 = vadd.f32 %v434, 1e-30
      %v451 = vadd.f32 %v435, 1e-30
      %v452 = vadd.f32 %v436, 1e-30
      %v453 = vadd.f32 %v437, 1e-30
      %v454 = vadd.f32 %v438, 1e-30
      %v455 = vadd.f32 %v439, 1e-30
      %v456 = vadd.f32 %v440, 1e-30
      %v457 = vrsqrt.pop %v441
      %v458 = vrsqrt.pop %v442
      %v459 = vrsqrt.pop %v443
      %v460 = vrsqrt.pop %v444
      %v461 = vrsqrt.pop %v445
      %v462 = vrsqrt.pop %v446
      %v463 = vrsqrt.pop %v447
      %v464 = vrsqrt.pop %v448
      %v465 = vrsqrt.pop %v449
      %v466 = vrsqrt.pop %v450
      %v467 = vrsqrt.pop %v451
      %v468 = vrsqrt.pop %v452
      %v469 = vrsqrt.pop %v453
      %v470 = vrsqrt.pop %v454
      %v471 = vrsqrt.pop %v455
      %v472 = vrsqrt.pop %v456
      %v473 = vmul.f32 %v361, %v457
      %v474 = vmul.f32 %v362, %v458
      %v475 = vmul.f32 %v363, %v459
      %v476 = vmul.f32 %v364, %v460
      %v477 = vmul.f32 %v365, %v461
      %v478 = vmul.f32 %v366, %v462
      %v479 = vmul.f32 %v367, %v463
      %v480 = vmul.f32 %v368, %v464
      %v481 = vmul.f32 %v369, %v465
      %v482 = vmul.f32 %v370, %v466
      %v483 = vmul.f32 %v371, %v467
      %v484 = vmul.f32 %v372, %v468
      %v485 = vmul.f32 %v373, %v469
      %v486 = vmul.f32 %v374, %v470
      %v487 = vmul.f32 %v375, %v471
      %v488 = vmul.f32 %v376, %v472
      %v489 = vpack.c.bf16 %v474, %v473
      %v490 = vpack.c.bf16 %v476, %v475
      %v491 = vpack.c.bf16 %v478, %v477
      %v492 = vpack.c.bf16 %v480, %v479
      %v493 = vpack.c.bf16 %v482, %v481
      %v494 = vpack.c.bf16 %v484, %v483
      %v495 = vpack.c.bf16 %v486, %v485
      %v496 = vpack.c.bf16 %v488, %v487
      %v497 = vld [vmem:[%s2] sm:$0xf]
      %v498 = vld [vmem:[%s2 + $0x4] sm:$0xf]
      %v499 = vld [vmem:[%s2 + $0x8] sm:$0xf]
      %v500 = vld [vmem:[%s2 + $0xc] sm:$0xf]
      %v501 = vld [vmem:[%s2 + $0x10] sm:$0xf]
      %v502 = vld [vmem:[%s2 + $0x14] sm:$0xf]
      %v503 = vld [vmem:[%s2 + $0x18] sm:$0xf]
      %v504 = vld [vmem:[%s2 + $0x1c] sm:$0xf]
      %v505 = vld [vmem:[%s2 + $0x20] sm:$0xf]
      %v506 = vld [vmem:[%s2 + $0x24] sm:$0xf]
      %v507 = vld [vmem:[%s2 + $0x28] sm:$0xf]
      %v508 = vld [vmem:[%s2 + $0x2c] sm:$0xf]
      %v509 = vld [vmem:[%s2 + $0x30] sm:$0xf]
      %v510 = vld [vmem:[%s2 + $0x34] sm:$0xf]
      %v511 = vld [vmem:[%s2 + $0x38] sm:$0xf]
      %v512 = vld [vmem:[%s2 + $0x3c] sm:$0xf]
      %v529 = vunpack.c.l.b16 %v497
      %v530 = vunpack.c.l.b16 %v498
      %v531 = vunpack.c.l.b16 %v499
      %v532 = vunpack.c.l.b16 %v500
      %v533 = vunpack.c.l.b16 %v501
      %v534 = vunpack.c.l.b16 %v502
      %v535 = vunpack.c.l.b16 %v503
      %v536 = vunpack.c.l.b16 %v504
      %v537 = vunpack.c.l.b16 %v505
      %v538 = vunpack.c.l.b16 %v506
      %v539 = vunpack.c.l.b16 %v507
      %v540 = vunpack.c.l.b16 %v508
      %v541 = vunpack.c.l.b16 %v509
      %v542 = vunpack.c.l.b16 %v510
      %v543 = vunpack.c.l.b16 %v511
      %v544 = vunpack.c.l.b16 %v512
      %v545 = vpack.c.b16 %v530, %v529
      %v546 = vpack.c.b16 %v532, %v531
      %v547 = vpack.c.b16 %v534, %v533
      %v548 = vpack.c.b16 %v536, %v535
      %v549 = vpack.c.b16 %v538, %v537
      %v550 = vpack.c.b16 %v540, %v539
      %v551 = vpack.c.b16 %v542, %v541
      %v552 = vpack.c.b16 %v544, %v543
      %561 = vmatprep.subr.bf16.mxu0 0
      %562 = vmatpush1.bf16.msra.mxu0 %v552
      %563 = vmatprep.subr.bf16.mxu0 0
      %564 = vmatpush1.bf16.msra.mxu0 %v551
      %565 = vmatprep.subr.bf16.mxu0 0
      %566 = vmatpush1.bf16.msra.mxu0 %v550
      %567 = vmatprep.subr.bf16.mxu0 0
      %568 = vmatpush1.bf16.msra.mxu0 %v549
      %569 = vmatprep.subr.bf16.mxu0 0
      %570 = vmatpush1.bf16.msra.mxu0 %v548
      %571 = vmatprep.subr.bf16.mxu0 0
      %572 = vmatpush1.bf16.msra.mxu0 %v547
      %573 = vmatprep.subr.bf16.mxu0 0
      %574 = vmatpush1.bf16.msra.mxu0 %v546
      %575 = vmatprep.subr.bf16.mxu0 0
      %576 = vmatpush1.bf16.msra.mxu0 %v545
      %577 = vmatprep.subr.bf16.mxu0 0
      %578 = vmatpush2.bf16.msra.mxu0 0
      %579 = vmatprep.subr.bf16.mxu0 0
      %580 = vmatpush2.bf16.msra.mxu0 0
      %581 = vmatprep.subr.bf16.mxu0 0
      %582 = vmatpush2.bf16.msra.mxu0 0
      %583 = vmatprep.subr.bf16.mxu0 0
      %584 = vmatpush2.bf16.msra.mxu0 0
      %585 = vmatprep.subr.bf16.mxu0 0
      %586 = vmatpush2.bf16.msra.mxu0 0
      %587 = vmatprep.subr.bf16.mxu0 0
      %588 = vmatpush2.bf16.msra.mxu0 0
      %589 = vmatprep.subr.bf16.mxu0 0
      %590 = vmatpush2.bf16.msra.mxu0 0
      %591 = vmatprep.subr.bf16.mxu0 0
      %592 = vmatpush2.bf16.msra.mxu0 0
      %593 = vmatprep.mubr.bf16.mxu0 0
      %594 = vmatmul.mubr.bf16.gmra.mxu0 %v489
      %v595 = vpop.f32.mrf.mxu0
      %v596 = vadd.f32 0.0, %v595
      %v597 = vpop.f32.mrf.mxu0
      %v598 = vpop.f32.mrf.mxu0
      %v599 = vadd.f32 0.0, %v598
      %v600 = vpop.f32.mrf.mxu0
      %601 = vmatprep.mubr.bf16.mxu0 0
      %602 = vmatmul.mubr.bf16.gmra.mxu0 %v490
      %v603 = vpop.f32.mrf.mxu0
      %v604 = vadd.f32 0.0, %v603
      %v605 = vpop.f32.mrf.mxu0
      %v606 = vpop.f32.mrf.mxu0
      %v607 = vadd.f32 0.0, %v606
      %v608 = vpop.f32.mrf.mxu0
      %609 = vmatprep.mubr.bf16.mxu0 0
      %610 = vmatmul.mubr.bf16.gmra.mxu0 %v491
      %v611 = vpop.f32.mrf.mxu0
      %v612 = vadd.f32 0.0, %v611
      %v613 = vpop.f32.mrf.mxu0
      %v614 = vpop.f32.mrf.mxu0
      %v615 = vadd.f32 0.0, %v614
      %v616 = vpop.f32.mrf.mxu0
      %617 = vmatprep.mubr.bf16.mxu0 0
      %618 = vmatmul.mubr.bf16.gmra.mxu0 %v492
      %v619 = vpop.f32.mrf.mxu0
      %v620 = vadd.f32 0.0, %v619
      %v621 = vpop.f32.mrf.mxu0
      %v622 = vpop.f32.mrf.mxu0
      %v623 = vadd.f32 0.0, %v622
      %v624 = vpop.f32.mrf.mxu0
      %625 = vmatprep.mubr.bf16.mxu0 0
      %626 = vmatmul.mubr.bf16.gmra.mxu0 %v493
      %v627 = vpop.f32.mrf.mxu0
      %v628 = vadd.f32 0.0, %v627
      %v629 = vpop.f32.mrf.mxu0
      %v630 = vpop.f32.mrf.mxu0
      %v631 = vadd.f32 0.0, %v630
      %v632 = vpop.f32.mrf.mxu0
      %633 = vmatprep.mubr.bf16.mxu0 0
      %634 = vmatmul.mubr.bf16.gmra.mxu0 %v494
      %v635 = vpop.f32.mrf.mxu0
      %v636 = vadd.f32 0.0, %v635
      %v637 = vpop.f32.mrf.mxu0
      %v638 = vpop.f32.mrf.mxu0
      %v639 = vadd.f32 0.0, %v638
      %v640 = vpop.f32.mrf.mxu0
      %641 = vmatprep.mubr.bf16.mxu0 0
      %642 = vmatmul.mubr.bf16.gmra.mxu0 %v495
      %v643 = vpop.f32.mrf.mxu0
      %v644 = vadd.f32 0.0, %v643
      %v645 = vpop.f32.mrf.mxu0
      %v646 = vpop.f32.mrf.mxu0
      %v647 = vadd.f32 0.0, %v646
      %v648 = vpop.f32.mrf.mxu0
      %649 = vmatprep.mubr.bf16.mxu0 0
      %650 = vmatmul.mubr.bf16.gmra.mxu0 %v496
      %v651 = vpop.f32.mrf.mxu0
      %v652 = vadd.f32 0.0, %v651
      %v653 = vpop.f32.mrf.mxu0
      %v654 = vpop.f32.mrf.mxu0
      %v655 = vadd.f32 0.0, %v654
      %v656 = vpop.f32.mrf.mxu0
      %657 = vdwg.mxu0
      %v658 = vld [vmem:[%s269] sm:$0xff]
      %v659 = vld [vmem:[%s269 + $0x8] sm:$0xff]
      %v660 = vld [vmem:[%s269 + $0x10] sm:$0xff]
      %v661 = vld [vmem:[%s269 + $0x18] sm:$0xff]
      %v662 = vld [vmem:[%s269 + $0x20] sm:$0xff]
      %v663 = vld [vmem:[%s269 + $0x28] sm:$0xff]
      %v664 = vld [vmem:[%s269 + $0x30] sm:$0xff]
      %v665 = vld [vmem:[%s269 + $0x38] sm:$0xff]
      %v666 = vld [vmem:[%s269 + $0x40] sm:$0xff]
      %v667 = vld [vmem:[%s269 + $0x48] sm:$0xff]
      %v668 = vld [vmem:[%s269 + $0x50] sm:$0xff]
      %v669 = vld [vmem:[%s269 + $0x58] sm:$0xff]
      %v670 = vld [vmem:[%s269 + $0x60] sm:$0xff]
      %v671 = vld [vmem:[%s269 + $0x68] sm:$0xff]
      %v672 = vld [vmem:[%s269 + $0x70] sm:$0xff]
      %v673 = vld [vmem:[%s269 + $0x78] sm:$0xff]
      %v674 = vmul.f32 %v596, %v658
      %v675 = vmul.f32 %v599, %v659
      %v676 = vmul.f32 %v604, %v660
      %v677 = vmul.f32 %v607, %v661
      %v678 = vmul.f32 %v612, %v662
      %v679 = vmul.f32 %v615, %v663
      %v680 = vmul.f32 %v620, %v664
      %v681 = vmul.f32 %v623, %v665
      %v682 = vmul.f32 %v628, %v666
      %v683 = vmul.f32 %v631, %v667
      %v684 = vmul.f32 %v636, %v668
      %v685 = vmul.f32 %v639, %v669
      %v686 = vmul.f32 %v644, %v670
      %v687 = vmul.f32 %v647, %v671
      %v688 = vmul.f32 %v652, %v672
      %v689 = vmul.f32 %v655, %v673
      %v690 = vxor.u32 %v674, 2147483648
      %v691 = vxor.u32 %v675, 2147483648
      %v692 = vxor.u32 %v676, 2147483648
      %v693 = vxor.u32 %v677, 2147483648
      %v694 = vxor.u32 %v678, 2147483648
      %v695 = vxor.u32 %v679, 2147483648
      %v696 = vxor.u32 %v680, 2147483648
      %v697 = vxor.u32 %v681, 2147483648
      %v698 = vxor.u32 %v682, 2147483648
      %v699 = vxor.u32 %v683, 2147483648
      %v700 = vxor.u32 %v684, 2147483648
      %v701 = vxor.u32 %v685, 2147483648
      %v702 = vxor.u32 %v686, 2147483648
      %v703 = vxor.u32 %v687, 2147483648
      %v704 = vxor.u32 %v688, 2147483648
      %v705 = vxor.u32 %v689, 2147483648
      %v706 = vmul.f32 %v690, 1.442695
      %v707 = vpow.pop %v706
      %v708 = vmul.f32 %v691, 1.442695
      %v709 = vpow.pop %v708
      %v710 = vmul.f32 %v692, 1.442695
      %v711 = vpow.pop %v710
      %v712 = vmul.f32 %v693, 1.442695
      %v713 = vpow.pop %v712
      %v714 = vmul.f32 %v694, 1.442695
      %v715 = vpow.pop %v714
      %v716 = vmul.f32 %v695, 1.442695
      %v717 = vpow.pop %v716
      %v718 = vmul.f32 %v696, 1.442695
      %v719 = vpow.pop %v718
      %v720 = vmul.f32 %v697, 1.442695
      %v721 = vpow.pop %v720
      %v722 = vmul.f32 %v698, 1.442695
      %v723 = vpow.pop %v722
      %v724 = vmul.f32 %v699, 1.442695
      %v725 = vpow.pop %v724
      %v726 = vmul.f32 %v700, 1.442695
      %v727 = vpow.pop %v726
      %v728 = vmul.f32 %v701, 1.442695
      %v729 = vpow.pop %v728
      %v730 = vmul.f32 %v702, 1.442695
      %v731 = vpow.pop %v730
      %v732 = vmul.f32 %v703, 1.442695
      %v733 = vpow.pop %v732
      %v734 = vmul.f32 %v704, 1.442695
      %v735 = vpow.pop %v734
      %v736 = vmul.f32 %v705, 1.442695
      %v737 = vpow.pop %v736
      %v738 = vadd.f32 %v707, 1.0
      %v739 = vadd.f32 %v709, 1.0
      %v740 = vadd.f32 %v711, 1.0
      %v741 = vadd.f32 %v713, 1.0
      %v742 = vadd.f32 %v715, 1.0
      %v743 = vadd.f32 %v717, 1.0
      %v744 = vadd.f32 %v719, 1.0
      %v745 = vadd.f32 %v721, 1.0
      %v746 = vadd.f32 %v723, 1.0
      %v747 = vadd.f32 %v725, 1.0
      %v748 = vadd.f32 %v727, 1.0
      %v749 = vadd.f32 %v729, 1.0
      %v750 = vadd.f32 %v731, 1.0
      %v751 = vadd.f32 %v733, 1.0
      %v752 = vadd.f32 %v735, 1.0
      %v753 = vadd.f32 %v737, 1.0
      %v754 = vrcp.pop %v738
      %v755 = vmul.f32 1.0, %v754
      %v756 = vrcp.pop %v739
      %v757 = vmul.f32 1.0, %v756
      %v758 = vrcp.pop %v740
      %v759 = vmul.f32 1.0, %v758
      %v760 = vrcp.pop %v741
      %v761 = vmul.f32 1.0, %v760
      %v762 = vrcp.pop %v742
      %v763 = vmul.f32 1.0, %v762
      %v764 = vrcp.pop %v743
      %v765 = vmul.f32 1.0, %v764
      %v766 = vrcp.pop %v744
      %v767 = vmul.f32 1.0, %v766
      %v768 = vrcp.pop %v745
      %v769 = vmul.f32 1.0, %v768
      %v770 = vrcp.pop %v746
      %v771 = vmul.f32 1.0, %v770
      %v772 = vrcp.pop %v747
      %v773 = vmul.f32 1.0, %v772
      %v774 = vrcp.pop %v748
      %v775 = vmul.f32 1.0, %v774
      %v776 = vrcp.pop %v749
      %v777 = vmul.f32 1.0, %v776
      %v778 = vrcp.pop %v750
      %v779 = vmul.f32 1.0, %v778
      %v780 = vrcp.pop %v751
      %v781 = vmul.f32 1.0, %v780
      %v782 = vrcp.pop %v752
      %v783 = vmul.f32 1.0, %v782
      %v784 = vrcp.pop %v753
      %v785 = vmul.f32 1.0, %v784
      %v786 = vmul.f32 %v674, %v755
      %v787 = vmul.f32 %v675, %v757
      %v788 = vmul.f32 %v676, %v759
      %v789 = vmul.f32 %v677, %v761
      %v790 = vmul.f32 %v678, %v763
      %v791 = vmul.f32 %v679, %v765
      %v792 = vmul.f32 %v680, %v767
      %v793 = vmul.f32 %v681, %v769
      %v794 = vmul.f32 %v682, %v771
      %v795 = vmul.f32 %v683, %v773
      %v796 = vmul.f32 %v684, %v775
      %v797 = vmul.f32 %v685, %v777
      %v798 = vmul.f32 %v686, %v779
      %v799 = vmul.f32 %v687, %v781
      %v800 = vmul.f32 %v688, %v783
      %v801 = vmul.f32 %v689, %v785
      %v802 = vmul.f32 %v786, 1.6765
      %v803 = vmul.f32 %v787, 1.6765
      %v804 = vmul.f32 %v788, 1.6765
      %v805 = vmul.f32 %v789, 1.6765
      %v806 = vmul.f32 %v790, 1.6765
      %v807 = vmul.f32 %v791, 1.6765
      %v808 = vmul.f32 %v792, 1.6765
      %v809 = vmul.f32 %v793, 1.6765
      %v810 = vmul.f32 %v794, 1.6765
      %v811 = vmul.f32 %v795, 1.6765
      %v812 = vmul.f32 %v796, 1.6765
      %v813 = vmul.f32 %v797, 1.6765
      %v814 = vmul.f32 %v798, 1.6765
      %v815 = vmul.f32 %v799, 1.6765
      %v816 = vmul.f32 %v800, 1.6765
      %v817 = vmul.f32 %v801, 1.6765
      %v818 = vpack.c.bf16 %v803, %v802
      %v819 = vpack.c.bf16 %v805, %v804
      %v820 = vpack.c.bf16 %v807, %v806
      %v821 = vpack.c.bf16 %v809, %v808
      %v822 = vpack.c.bf16 %v811, %v810
      %v823 = vpack.c.bf16 %v813, %v812
      %v824 = vpack.c.bf16 %v815, %v814
      %v825 = vpack.c.bf16 %v817, %v816
      %v826 = vld [vmem:[%s3] sm:$0xf]
      %v827 = vld [vmem:[%s3 + $0x4] sm:$0xf]
      %v828 = vld [vmem:[%s3 + $0x8] sm:$0xf]
      %v829 = vld [vmem:[%s3 + $0xc] sm:$0xf]
      %v830 = vld [vmem:[%s3 + $0x10] sm:$0xf]
      %v831 = vld [vmem:[%s3 + $0x14] sm:$0xf]
      %v832 = vld [vmem:[%s3 + $0x18] sm:$0xf]
      %v833 = vld [vmem:[%s3 + $0x1c] sm:$0xf]
      %v834 = vld [vmem:[%s3 + $0x20] sm:$0xf]
      %v835 = vld [vmem:[%s3 + $0x24] sm:$0xf]
      %v836 = vld [vmem:[%s3 + $0x28] sm:$0xf]
      %v837 = vld [vmem:[%s3 + $0x2c] sm:$0xf]
      %v838 = vld [vmem:[%s3 + $0x30] sm:$0xf]
      %v839 = vld [vmem:[%s3 + $0x34] sm:$0xf]
      %v840 = vld [vmem:[%s3 + $0x38] sm:$0xf]
      %v841 = vld [vmem:[%s3 + $0x3c] sm:$0xf]
      %v858 = vunpack.c.l.b16 %v826
      %v859 = vunpack.c.l.b16 %v827
      %v860 = vunpack.c.l.b16 %v828
      %v861 = vunpack.c.l.b16 %v829
      %v862 = vunpack.c.l.b16 %v830
      %v863 = vunpack.c.l.b16 %v831
      %v864 = vunpack.c.l.b16 %v832
      %v865 = vunpack.c.l.b16 %v833
      %v866 = vunpack.c.l.b16 %v834
      %v867 = vunpack.c.l.b16 %v835
      %v868 = vunpack.c.l.b16 %v836
      %v869 = vunpack.c.l.b16 %v837
      %v870 = vunpack.c.l.b16 %v838
      %v871 = vunpack.c.l.b16 %v839
      %v872 = vunpack.c.l.b16 %v840
      %v873 = vunpack.c.l.b16 %v841
      %v874 = vpack.c.b16 %v859, %v858
      %v875 = vpack.c.b16 %v861, %v860
      %v876 = vpack.c.b16 %v863, %v862
      %v877 = vpack.c.b16 %v865, %v864
      %v878 = vpack.c.b16 %v867, %v866
      %v879 = vpack.c.b16 %v869, %v868
      %v880 = vpack.c.b16 %v871, %v870
      %v881 = vpack.c.b16 %v873, %v872
      %890 = vmatprep.subr.bf16.mxu0 0
      %891 = vmatpush1.bf16.msra.mxu0 %v881
      %892 = vmatprep.subr.bf16.mxu0 0
      %893 = vmatpush1.bf16.msra.mxu0 %v880
      %894 = vmatprep.subr.bf16.mxu0 0
      %895 = vmatpush1.bf16.msra.mxu0 %v879
      %896 = vmatprep.subr.bf16.mxu0 0
      %897 = vmatpush1.bf16.msra.mxu0 %v878
      %898 = vmatprep.subr.bf16.mxu0 0
      %899 = vmatpush1.bf16.msra.mxu0 %v877
      %900 = vmatprep.subr.bf16.mxu0 0
      %901 = vmatpush1.bf16.msra.mxu0 %v876
      %902 = vmatprep.subr.bf16.mxu0 0
      %903 = vmatpush1.bf16.msra.mxu0 %v875
      %904 = vmatprep.subr.bf16.mxu0 0
      %905 = vmatpush1.bf16.msra.mxu0 %v874
      %906 = vmatprep.subr.bf16.mxu0 0
      %907 = vmatpush2.bf16.msra.mxu0 0
      %908 = vmatprep.subr.bf16.mxu0 0
      %909 = vmatpush2.bf16.msra.mxu0 0
      %910 = vmatprep.subr.bf16.mxu0 0
      %911 = vmatpush2.bf16.msra.mxu0 0
      %912 = vmatprep.subr.bf16.mxu0 0
      %913 = vmatpush2.bf16.msra.mxu0 0
      %914 = vmatprep.subr.bf16.mxu0 0
      %915 = vmatpush2.bf16.msra.mxu0 0
      %916 = vmatprep.subr.bf16.mxu0 0
      %917 = vmatpush2.bf16.msra.mxu0 0
      %918 = vmatprep.subr.bf16.mxu0 0
      %919 = vmatpush2.bf16.msra.mxu0 0
      %920 = vmatprep.subr.bf16.mxu0 0
      %921 = vmatpush2.bf16.msra.mxu0 0
      %922 = vmatprep.mubr.bf16.mxu0 0
      %923 = vmatmul.mubr.bf16.gmra.mxu0 %v818
      %v924 = vpop.f32.mrf.mxu0
      %v925 = vadd.f32 0.0, %v924
      %v926 = vpop.f32.mrf.mxu0
      %v927 = vpop.f32.mrf.mxu0
      %v928 = vadd.f32 0.0, %v927
      %v929 = vpop.f32.mrf.mxu0
      %930 = vmatprep.mubr.bf16.mxu0 0
      %931 = vmatmul.mubr.bf16.gmra.mxu0 %v819
      %v932 = vpop.f32.mrf.mxu0
      %v933 = vadd.f32 0.0, %v932
      %v934 = vpop.f32.mrf.mxu0
      %v935 = vpop.f32.mrf.mxu0
      %v936 = vadd.f32 0.0, %v935
      %v937 = vpop.f32.mrf.mxu0
      %938 = vmatprep.mubr.bf16.mxu0 0
      %939 = vmatmul.mubr.bf16.gmra.mxu0 %v820
      %v940 = vpop.f32.mrf.mxu0
      %v941 = vadd.f32 0.0, %v940
      %v942 = vpop.f32.mrf.mxu0
      %v943 = vpop.f32.mrf.mxu0
      %v944 = vadd.f32 0.0, %v943
      %v945 = vpop.f32.mrf.mxu0
      %946 = vmatprep.mubr.bf16.mxu0 0
      %947 = vmatmul.mubr.bf16.gmra.mxu0 %v821
      %v948 = vpop.f32.mrf.mxu0
      %v949 = vadd.f32 0.0, %v948
      %v950 = vpop.f32.mrf.mxu0
      %v951 = vpop.f32.mrf.mxu0
      %v952 = vadd.f32 0.0, %v951
      %v953 = vpop.f32.mrf.mxu0
      %954 = vmatprep.mubr.bf16.mxu0 0
      %955 = vmatmul.mubr.bf16.gmra.mxu0 %v822
      %v956 = vpop.f32.mrf.mxu0
      %v957 = vadd.f32 0.0, %v956
      %v958 = vpop.f32.mrf.mxu0
      %v959 = vpop.f32.mrf.mxu0
      %v960 = vadd.f32 0.0, %v959
      %v961 = vpop.f32.mrf.mxu0
      %962 = vmatprep.mubr.bf16.mxu0 0
      %963 = vmatmul.mubr.bf16.gmra.mxu0 %v823
      %v964 = vpop.f32.mrf.mxu0
      %v965 = vadd.f32 0.0, %v964
      %v966 = vpop.f32.mrf.mxu0
      %v967 = vpop.f32.mrf.mxu0
      %v968 = vadd.f32 0.0, %v967
      %v969 = vpop.f32.mrf.mxu0
      %970 = vmatprep.mubr.bf16.mxu0 0
      %971 = vmatmul.mubr.bf16.gmra.mxu0 %v824
      %v972 = vpop.f32.mrf.mxu0
      %v973 = vadd.f32 0.0, %v972
      %v974 = vpop.f32.mrf.mxu0
      %v975 = vpop.f32.mrf.mxu0
      %v976 = vadd.f32 0.0, %v975
      %v977 = vpop.f32.mrf.mxu0
      %978 = vmatprep.mubr.bf16.mxu0 0
      %979 = vmatmul.mubr.bf16.gmra.mxu0 %v825
      %v980 = vpop.f32.mrf.mxu0
      %v981 = vadd.f32 0.0, %v980
      %v982 = vpop.f32.mrf.mxu0
      %v983 = vpop.f32.mrf.mxu0
      %v984 = vadd.f32 0.0, %v983
      %v985 = vpop.f32.mrf.mxu0
      %986 = vdwg.mxu0
      %v987 = vxor.u32 %v925, 2147483648
      %v988 = vxor.u32 %v928, 2147483648
      %v989 = vxor.u32 %v933, 2147483648
      %v990 = vxor.u32 %v936, 2147483648
      %v991 = vxor.u32 %v941, 2147483648
      %v992 = vxor.u32 %v944, 2147483648
      %v993 = vxor.u32 %v949, 2147483648
      %v994 = vxor.u32 %v952, 2147483648
      %v995 = vxor.u32 %v957, 2147483648
      %v996 = vxor.u32 %v960, 2147483648
      %v997 = vxor.u32 %v965, 2147483648
      %v998 = vxor.u32 %v968, 2147483648
      %v999 = vxor.u32 %v973, 2147483648
      %v1000 = vxor.u32 %v976, 2147483648
      %v1001 = vxor.u32 %v981, 2147483648
      %v1002 = vxor.u32 %v984, 2147483648
      %v1003 = vmul.f32 %v987, 1.442695
      %v1004 = vpow.pop %v1003
      %v1005 = vmul.f32 %v988, 1.442695
      %v1006 = vpow.pop %v1005
      %v1007 = vmul.f32 %v989, 1.442695
      %v1008 = vpow.pop %v1007
      %v1009 = vmul.f32 %v990, 1.442695
      %v1010 = vpow.pop %v1009
      %v1011 = vmul.f32 %v991, 1.442695
      %v1012 = vpow.pop %v1011
      %v1013 = vmul.f32 %v992, 1.442695
      %v1014 = vpow.pop %v1013
      %v1015 = vmul.f32 %v993, 1.442695
      %v1016 = vpow.pop %v1015
      %v1017 = vmul.f32 %v994, 1.442695
      %v1018 = vpow.pop %v1017
      %v1019 = vmul.f32 %v995, 1.442695
      %v1020 = vpow.pop %v1019
      %v1021 = vmul.f32 %v996, 1.442695
      %v1022 = vpow.pop %v1021
      %v1023 = vmul.f32 %v997, 1.442695
      %v1024 = vpow.pop %v1023
      %v1025 = vmul.f32 %v998, 1.442695
      %v1026 = vpow.pop %v1025
      %v1027 = vmul.f32 %v999, 1.442695
      %v1028 = vpow.pop %v1027
      %v1029 = vmul.f32 %v1000, 1.442695
      %v1030 = vpow.pop %v1029
      %v1031 = vmul.f32 %v1001, 1.442695
      %v1032 = vpow.pop %v1031
      %v1033 = vmul.f32 %v1002, 1.442695
      %v1034 = vpow.pop %v1033
      %v1035 = vadd.f32 %v1004, 1.0
      %v1036 = vadd.f32 %v1006, 1.0
      %v1037 = vadd.f32 %v1008, 1.0
      %v1038 = vadd.f32 %v1010, 1.0
      %v1039 = vadd.f32 %v1012, 1.0
      %v1040 = vadd.f32 %v1014, 1.0
      %v1041 = vadd.f32 %v1016, 1.0
      %v1042 = vadd.f32 %v1018, 1.0
      %v1043 = vadd.f32 %v1020, 1.0
      %v1044 = vadd.f32 %v1022, 1.0
      %v1045 = vadd.f32 %v1024, 1.0
      %v1046 = vadd.f32 %v1026, 1.0
      %v1047 = vadd.f32 %v1028, 1.0
      %v1048 = vadd.f32 %v1030, 1.0
      %v1049 = vadd.f32 %v1032, 1.0
      %v1050 = vadd.f32 %v1034, 1.0
      %v1051 = vrcp.pop %v1035
      %v1052 = vmul.f32 1.0, %v1051
      %v1053 = vrcp.pop %v1036
      %v1054 = vmul.f32 1.0, %v1053
      %v1055 = vrcp.pop %v1037
      %v1056 = vmul.f32 1.0, %v1055
      %v1057 = vrcp.pop %v1038
      %v1058 = vmul.f32 1.0, %v1057
      %v1059 = vrcp.pop %v1039
      %v1060 = vmul.f32 1.0, %v1059
      %v1061 = vrcp.pop %v1040
      %v1062 = vmul.f32 1.0, %v1061
      %v1063 = vrcp.pop %v1041
      %v1064 = vmul.f32 1.0, %v1063
      %v1065 = vrcp.pop %v1042
      %v1066 = vmul.f32 1.0, %v1065
      %v1067 = vrcp.pop %v1043
      %v1068 = vmul.f32 1.0, %v1067
      %v1069 = vrcp.pop %v1044
      %v1070 = vmul.f32 1.0, %v1069
      %v1071 = vrcp.pop %v1045
      %v1072 = vmul.f32 1.0, %v1071
      %v1073 = vrcp.pop %v1046
      %v1074 = vmul.f32 1.0, %v1073
      %v1075 = vrcp.pop %v1047
      %v1076 = vmul.f32 1.0, %v1075
      %v1077 = vrcp.pop %v1048
      %v1078 = vmul.f32 1.0, %v1077
      %v1079 = vrcp.pop %v1049
      %v1080 = vmul.f32 1.0, %v1079
      %v1081 = vrcp.pop %v1050
      %v1082 = vmul.f32 1.0, %v1081
      %v1083 = vmul.f32 %v925, %v1052
      %v1084 = vmul.f32 %v928, %v1054
      %v1085 = vmul.f32 %v933, %v1056
      %v1086 = vmul.f32 %v936, %v1058
      %v1087 = vmul.f32 %v941, %v1060
      %v1088 = vmul.f32 %v944, %v1062
      %v1089 = vmul.f32 %v949, %v1064
      %v1090 = vmul.f32 %v952, %v1066
      %v1091 = vmul.f32 %v957, %v1068
      %v1092 = vmul.f32 %v960, %v1070
      %v1093 = vmul.f32 %v965, %v1072
      %v1094 = vmul.f32 %v968, %v1074
      %v1095 = vmul.f32 %v973, %v1076
      %v1096 = vmul.f32 %v976, %v1078
      %v1097 = vmul.f32 %v981, %v1080
      %v1098 = vmul.f32 %v984, %v1082
      %v1099 = vmul.f32 %v1083, 1.6765
      %v1100 = vmul.f32 %v1084, 1.6765
      %v1101 = vmul.f32 %v1085, 1.6765
      %v1102 = vmul.f32 %v1086, 1.6765
      %v1103 = vmul.f32 %v1087, 1.6765
      %v1104 = vmul.f32 %v1088, 1.6765
      %v1105 = vmul.f32 %v1089, 1.6765
      %v1106 = vmul.f32 %v1090, 1.6765
      %v1107 = vmul.f32 %v1091, 1.6765
      %v1108 = vmul.f32 %v1092, 1.6765
      %v1109 = vmul.f32 %v1093, 1.6765
      %v1110 = vmul.f32 %v1094, 1.6765
      %v1111 = vmul.f32 %v1095, 1.6765
      %v1112 = vmul.f32 %v1096, 1.6765
      %v1113 = vmul.f32 %v1097, 1.6765
      %v1114 = vmul.f32 %v1098, 1.6765
      %v1115 = vpack.c.bf16 %v1100, %v1099
      %v1116 = vpack.c.bf16 %v1102, %v1101
      %v1117 = vpack.c.bf16 %v1104, %v1103
      %v1118 = vpack.c.bf16 %v1106, %v1105
      %v1119 = vpack.c.bf16 %v1108, %v1107
      %v1120 = vpack.c.bf16 %v1110, %v1109
      %v1121 = vpack.c.bf16 %v1112, %v1111
      %v1122 = vpack.c.bf16 %v1114, %v1113
      %v1123 = vld [vmem:[%s4] sm:$0xf]
      %v1124 = vld [vmem:[%s4 + $0x4] sm:$0xf]
      %v1125 = vld [vmem:[%s4 + $0x8] sm:$0xf]
      %v1126 = vld [vmem:[%s4 + $0xc] sm:$0xf]
      %v1127 = vld [vmem:[%s4 + $0x10] sm:$0xf]
      %v1128 = vld [vmem:[%s4 + $0x14] sm:$0xf]
      %v1129 = vld [vmem:[%s4 + $0x18] sm:$0xf]
      %v1130 = vld [vmem:[%s4 + $0x1c] sm:$0xf]
      %v1131 = vld [vmem:[%s4 + $0x20] sm:$0xf]
      %v1132 = vld [vmem:[%s4 + $0x24] sm:$0xf]
      %v1133 = vld [vmem:[%s4 + $0x28] sm:$0xf]
      %v1134 = vld [vmem:[%s4 + $0x2c] sm:$0xf]
      %v1135 = vld [vmem:[%s4 + $0x30] sm:$0xf]
      %v1136 = vld [vmem:[%s4 + $0x34] sm:$0xf]
      %v1137 = vld [vmem:[%s4 + $0x38] sm:$0xf]
      %v1138 = vld [vmem:[%s4 + $0x3c] sm:$0xf]
      %v1155 = vunpack.c.l.b16 %v1123
      %v1156 = vunpack.c.l.b16 %v1124
      %v1157 = vunpack.c.l.b16 %v1125
      %v1158 = vunpack.c.l.b16 %v1126
      %v1159 = vunpack.c.l.b16 %v1127
      %v1160 = vunpack.c.l.b16 %v1128
      %v1161 = vunpack.c.l.b16 %v1129
      %v1162 = vunpack.c.l.b16 %v1130
      %v1163 = vunpack.c.l.b16 %v1131
      %v1164 = vunpack.c.l.b16 %v1132
      %v1165 = vunpack.c.l.b16 %v1133
      %v1166 = vunpack.c.l.b16 %v1134
      %v1167 = vunpack.c.l.b16 %v1135
      %v1168 = vunpack.c.l.b16 %v1136
      %v1169 = vunpack.c.l.b16 %v1137
      %v1170 = vunpack.c.l.b16 %v1138
      %v1171 = vpack.c.b16 %v1156, %v1155
      %v1172 = vpack.c.b16 %v1158, %v1157
      %v1173 = vpack.c.b16 %v1160, %v1159
      %v1174 = vpack.c.b16 %v1162, %v1161
      %v1175 = vpack.c.b16 %v1164, %v1163
      %v1176 = vpack.c.b16 %v1166, %v1165
      %v1177 = vpack.c.b16 %v1168, %v1167
      %v1178 = vpack.c.b16 %v1170, %v1169
      %1187 = vmatprep.subr.bf16.mxu0 0
      %1188 = vmatpush1.bf16.msra.mxu0 %v1178
      %1189 = vmatprep.subr.bf16.mxu0 0
      %1190 = vmatpush1.bf16.msra.mxu0 %v1177
      %1191 = vmatprep.subr.bf16.mxu0 0
      %1192 = vmatpush1.bf16.msra.mxu0 %v1176
      %1193 = vmatprep.subr.bf16.mxu0 0
      %1194 = vmatpush1.bf16.msra.mxu0 %v1175
      %1195 = vmatprep.subr.bf16.mxu0 0
      %1196 = vmatpush1.bf16.msra.mxu0 %v1174
      %1197 = vmatprep.subr.bf16.mxu0 0
      %1198 = vmatpush1.bf16.msra.mxu0 %v1173
      %1199 = vmatprep.subr.bf16.mxu0 0
      %1200 = vmatpush1.bf16.msra.mxu0 %v1172
      %1201 = vmatprep.subr.bf16.mxu0 0
      %1202 = vmatpush1.bf16.msra.mxu0 %v1171
      %1203 = vmatprep.subr.bf16.mxu0 0
      %1204 = vmatpush2.bf16.msra.mxu0 0
      %1205 = vmatprep.subr.bf16.mxu0 0
      %1206 = vmatpush2.bf16.msra.mxu0 0
      %1207 = vmatprep.subr.bf16.mxu0 0
      %1208 = vmatpush2.bf16.msra.mxu0 0
      %1209 = vmatprep.subr.bf16.mxu0 0
      %1210 = vmatpush2.bf16.msra.mxu0 0
      %1211 = vmatprep.subr.bf16.mxu0 0
      %1212 = vmatpush2.bf16.msra.mxu0 0
      %1213 = vmatprep.subr.bf16.mxu0 0
      %1214 = vmatpush2.bf16.msra.mxu0 0
      %1215 = vmatprep.subr.bf16.mxu0 0
      %1216 = vmatpush2.bf16.msra.mxu0 0
      %1217 = vmatprep.subr.bf16.mxu0 0
      %1218 = vmatpush2.bf16.msra.mxu0 0
      %1219 = vmatprep.mubr.bf16.mxu0 0
      %1220 = vmatmul.mubr.bf16.gmra.mxu0 %v1115
      %v1221 = vpop.f32.mrf.mxu0
      %v1222 = vadd.f32 0.0, %v1221
      %v1223 = vpop.f32.mrf.mxu0
      %v1224 = vpop.f32.mrf.mxu0
      %v1225 = vadd.f32 0.0, %v1224
      %v1226 = vpop.f32.mrf.mxu0
      %1227 = vmatprep.mubr.bf16.mxu0 0
      %1228 = vmatmul.mubr.bf16.gmra.mxu0 %v1116
      %v1229 = vpop.f32.mrf.mxu0
      %v1230 = vadd.f32 0.0, %v1229
      %v1231 = vpop.f32.mrf.mxu0
      %v1232 = vpop.f32.mrf.mxu0
      %v1233 = vadd.f32 0.0, %v1232
      %v1234 = vpop.f32.mrf.mxu0
      %1235 = vmatprep.mubr.bf16.mxu0 0
      %1236 = vmatmul.mubr.bf16.gmra.mxu0 %v1117
      %v1237 = vpop.f32.mrf.mxu0
      %v1238 = vadd.f32 0.0, %v1237
      %v1239 = vpop.f32.mrf.mxu0
      %v1240 = vpop.f32.mrf.mxu0
      %v1241 = vadd.f32 0.0, %v1240
      %v1242 = vpop.f32.mrf.mxu0
      %1243 = vmatprep.mubr.bf16.mxu0 0
      %1244 = vmatmul.mubr.bf16.gmra.mxu0 %v1118
      %v1245 = vpop.f32.mrf.mxu0
      %v1246 = vadd.f32 0.0, %v1245
      %v1247 = vpop.f32.mrf.mxu0
      %v1248 = vpop.f32.mrf.mxu0
      %v1249 = vadd.f32 0.0, %v1248
      %v1250 = vpop.f32.mrf.mxu0
      %1251 = vmatprep.mubr.bf16.mxu0 0
      %1252 = vmatmul.mubr.bf16.gmra.mxu0 %v1119
      %v1253 = vpop.f32.mrf.mxu0
      %v1254 = vadd.f32 0.0, %v1253
      %v1255 = vpop.f32.mrf.mxu0
      %v1256 = vpop.f32.mrf.mxu0
      %v1257 = vadd.f32 0.0, %v1256
      %v1258 = vpop.f32.mrf.mxu0
      %1259 = vmatprep.mubr.bf16.mxu0 0
      %1260 = vmatmul.mubr.bf16.gmra.mxu0 %v1120
      %v1261 = vpop.f32.mrf.mxu0
      %v1262 = vadd.f32 0.0, %v1261
      %v1263 = vpop.f32.mrf.mxu0
      %v1264 = vpop.f32.mrf.mxu0
      %v1265 = vadd.f32 0.0, %v1264
      %v1266 = vpop.f32.mrf.mxu0
      %1267 = vmatprep.mubr.bf16.mxu0 0
      %1268 = vmatmul.mubr.bf16.gmra.mxu0 %v1121
      %v1269 = vpop.f32.mrf.mxu0
      %v1270 = vadd.f32 0.0, %v1269
      %v1271 = vpop.f32.mrf.mxu0
      %v1272 = vpop.f32.mrf.mxu0
      %v1273 = vadd.f32 0.0, %v1272
      %v1274 = vpop.f32.mrf.mxu0
      %1275 = vmatprep.mubr.bf16.mxu0 0
      %1276 = vmatmul.mubr.bf16.gmra.mxu0 %v1122
      %v1277 = vpop.f32.mrf.mxu0
      %v1278 = vadd.f32 0.0, %v1277
      %v1279 = vpop.f32.mrf.mxu0
      %v1280 = vpop.f32.mrf.mxu0
      %v1281 = vadd.f32 0.0, %v1280
      %v1282 = vpop.f32.mrf.mxu0
      %1283 = vdwg.mxu0
      %v1284 = vxor.u32 %v1222, 2147483648
      %v1285 = vxor.u32 %v1225, 2147483648
      %v1286 = vxor.u32 %v1230, 2147483648
      %v1287 = vxor.u32 %v1233, 2147483648
      %v1288 = vxor.u32 %v1238, 2147483648
      %v1289 = vxor.u32 %v1241, 2147483648
      %v1290 = vxor.u32 %v1246, 2147483648
      %v1291 = vxor.u32 %v1249, 2147483648
      %v1292 = vxor.u32 %v1254, 2147483648
      %v1293 = vxor.u32 %v1257, 2147483648
      %v1294 = vxor.u32 %v1262, 2147483648
      %v1295 = vxor.u32 %v1265, 2147483648
      %v1296 = vxor.u32 %v1270, 2147483648
      %v1297 = vxor.u32 %v1273, 2147483648
      %v1298 = vxor.u32 %v1278, 2147483648
      %v1299 = vxor.u32 %v1281, 2147483648
      %v1300 = vmul.f32 %v1284, 1.442695
      %v1301 = vpow.pop %v1300
      %v1302 = vmul.f32 %v1285, 1.442695
      %v1303 = vpow.pop %v1302
      %v1304 = vmul.f32 %v1286, 1.442695
      %v1305 = vpow.pop %v1304
      %v1306 = vmul.f32 %v1287, 1.442695
      %v1307 = vpow.pop %v1306
      %v1308 = vmul.f32 %v1288, 1.442695
      %v1309 = vpow.pop %v1308
      %v1310 = vmul.f32 %v1289, 1.442695
      %v1311 = vpow.pop %v1310
      %v1312 = vmul.f32 %v1290, 1.442695
      %v1313 = vpow.pop %v1312
      %v1314 = vmul.f32 %v1291, 1.442695
      %v1315 = vpow.pop %v1314
      %v1316 = vmul.f32 %v1292, 1.442695
      %v1317 = vpow.pop %v1316
      %v1318 = vmul.f32 %v1293, 1.442695
      %v1319 = vpow.pop %v1318
      %v1320 = vmul.f32 %v1294, 1.442695
      %v1321 = vpow.pop %v1320
      %v1322 = vmul.f32 %v1295, 1.442695
      %v1323 = vpow.pop %v1322
      %v1324 = vmul.f32 %v1296, 1.442695
      %v1325 = vpow.pop %v1324
      %v1326 = vmul.f32 %v1297, 1.442695
      %v1327 = vpow.pop %v1326
      %v1328 = vmul.f32 %v1298, 1.442695
      %v1329 = vpow.pop %v1328
      %v1330 = vmul.f32 %v1299, 1.442695
      %v1331 = vpow.pop %v1330
      %v1332 = vadd.f32 %v1301, 1.0
      %v1333 = vadd.f32 %v1303, 1.0
      %v1334 = vadd.f32 %v1305, 1.0
      %v1335 = vadd.f32 %v1307, 1.0
      %v1336 = vadd.f32 %v1309, 1.0
      %v1337 = vadd.f32 %v1311, 1.0
      %v1338 = vadd.f32 %v1313, 1.0
      %v1339 = vadd.f32 %v1315, 1.0
      %v1340 = vadd.f32 %v1317, 1.0
      %v1341 = vadd.f32 %v1319, 1.0
      %v1342 = vadd.f32 %v1321, 1.0
      %v1343 = vadd.f32 %v1323, 1.0
      %v1344 = vadd.f32 %v1325, 1.0
      %v1345 = vadd.f32 %v1327, 1.0
      %v1346 = vadd.f32 %v1329, 1.0
      %v1347 = vadd.f32 %v1331, 1.0
      %v1348 = vrcp.pop %v1332
      %v1349 = vmul.f32 1.0, %v1348
      %v1350 = vrcp.pop %v1333
      %v1351 = vmul.f32 1.0, %v1350
      %v1352 = vrcp.pop %v1334
      %v1353 = vmul.f32 1.0, %v1352
      %v1354 = vrcp.pop %v1335
      %v1355 = vmul.f32 1.0, %v1354
      %v1356 = vrcp.pop %v1336
      %v1357 = vmul.f32 1.0, %v1356
      %v1358 = vrcp.pop %v1337
      %v1359 = vmul.f32 1.0, %v1358
      %v1360 = vrcp.pop %v1338
      %v1361 = vmul.f32 1.0, %v1360
      %v1362 = vrcp.pop %v1339
      %v1363 = vmul.f32 1.0, %v1362
      %v1364 = vrcp.pop %v1340
      %v1365 = vmul.f32 1.0, %v1364
      %v1366 = vrcp.pop %v1341
      %v1367 = vmul.f32 1.0, %v1366
      %v1368 = vrcp.pop %v1342
      %v1369 = vmul.f32 1.0, %v1368
      %v1370 = vrcp.pop %v1343
      %v1371 = vmul.f32 1.0, %v1370
      %v1372 = vrcp.pop %v1344
      %v1373 = vmul.f32 1.0, %v1372
      %v1374 = vrcp.pop %v1345
      %v1375 = vmul.f32 1.0, %v1374
      %v1376 = vrcp.pop %v1346
      %v1377 = vmul.f32 1.0, %v1376
      %v1378 = vrcp.pop %v1347
      %v1379 = vmul.f32 1.0, %v1378
      %v1380 = vmul.f32 %v1222, %v1349
      %v1381 = vmul.f32 %v1225, %v1351
      %v1382 = vmul.f32 %v1230, %v1353
      %v1383 = vmul.f32 %v1233, %v1355
      %v1384 = vmul.f32 %v1238, %v1357
      %v1385 = vmul.f32 %v1241, %v1359
      %v1386 = vmul.f32 %v1246, %v1361
      %v1387 = vmul.f32 %v1249, %v1363
      %v1388 = vmul.f32 %v1254, %v1365
      %v1389 = vmul.f32 %v1257, %v1367
      %v1390 = vmul.f32 %v1262, %v1369
      %v1391 = vmul.f32 %v1265, %v1371
      %v1392 = vmul.f32 %v1270, %v1373
      %v1393 = vmul.f32 %v1273, %v1375
      %v1394 = vmul.f32 %v1278, %v1377
      %v1395 = vmul.f32 %v1281, %v1379
      %v1396 = vmul.f32 %v1380, 1.6765
      %v1397 = vmul.f32 %v1381, 1.6765
      %v1398 = vmul.f32 %v1382, 1.6765
      %v1399 = vmul.f32 %v1383, 1.6765
      %v1400 = vmul.f32 %v1384, 1.6765
      %v1401 = vmul.f32 %v1385, 1.6765
      %v1402 = vmul.f32 %v1386, 1.6765
      %v1403 = vmul.f32 %v1387, 1.6765
      %v1404 = vmul.f32 %v1388, 1.6765
      %v1405 = vmul.f32 %v1389, 1.6765
      %v1406 = vmul.f32 %v1390, 1.6765
      %v1407 = vmul.f32 %v1391, 1.6765
      %v1408 = vmul.f32 %v1392, 1.6765
      %v1409 = vmul.f32 %v1393, 1.6765
      %v1410 = vmul.f32 %v1394, 1.6765
      %v1411 = vmul.f32 %v1395, 1.6765
      %v1412 = vld [vmem:[%s5] sm:$0x1]
      %v1414 = vlaneseq
      %v1415 = vshrl.u32 %v1414, 7
      %v1416 = vsub.s32 0, %v1415
      %v1417 = vrot.slane %v1412, %v1416
      %v1419 = vmul.f32 %v1396, %v1417
      %v1420 = vmul.f32 %v1397, %v1417
      %v1421 = vmul.f32 %v1398, %v1417
      %v1422 = vmul.f32 %v1399, %v1417
      %v1423 = vmul.f32 %v1400, %v1417
      %v1424 = vmul.f32 %v1401, %v1417
      %v1425 = vmul.f32 %v1402, %v1417
      %v1426 = vmul.f32 %v1403, %v1417
      %v1427 = vmul.f32 %v1404, %v1417
      %v1428 = vmul.f32 %v1405, %v1417
      %v1429 = vmul.f32 %v1406, %v1417
      %v1430 = vmul.f32 %v1407, %v1417
      %v1431 = vmul.f32 %v1408, %v1417
      %v1432 = vmul.f32 %v1409, %v1417
      %v1433 = vmul.f32 %v1410, %v1417
      %v1434 = vmul.f32 %v1411, %v1417
      %1435 = vadd.xlane.f32.xlu0 %v1419
      %v1436 = vpop.xlane.xlu0 %1435
      %1437 = vadd.xlane.f32.xlu0 %v1420
      %v1438 = vpop.xlane.xlu0 %1437
      %1439 = vadd.xlane.f32.xlu0 %v1421
      %v1440 = vpop.xlane.xlu0 %1439
      %1441 = vadd.xlane.f32.xlu0 %v1422
      %v1442 = vpop.xlane.xlu0 %1441
      %1443 = vadd.xlane.f32.xlu0 %v1423
      %v1444 = vpop.xlane.xlu0 %1443
      %1445 = vadd.xlane.f32.xlu0 %v1424
      %v1446 = vpop.xlane.xlu0 %1445
      %1447 = vadd.xlane.f32.xlu0 %v1425
      %v1448 = vpop.xlane.xlu0 %1447
      %1449 = vadd.xlane.f32.xlu0 %v1426
      %v1450 = vpop.xlane.xlu0 %1449
      %1451 = vadd.xlane.f32.xlu0 %v1427
      %v1452 = vpop.xlane.xlu0 %1451
      %1453 = vadd.xlane.f32.xlu0 %v1428
      %v1454 = vpop.xlane.xlu0 %1453
      %1455 = vadd.xlane.f32.xlu0 %v1429
      %v1456 = vpop.xlane.xlu0 %1455
      %1457 = vadd.xlane.f32.xlu0 %v1430
      %v1458 = vpop.xlane.xlu0 %1457
      %1459 = vadd.xlane.f32.xlu0 %v1431
      %v1460 = vpop.xlane.xlu0 %1459
      %1461 = vadd.xlane.f32.xlu0 %v1432
      %v1462 = vpop.xlane.xlu0 %1461
      %1463 = vadd.xlane.f32.xlu0 %v1433
      %v1464 = vpop.xlane.xlu0 %1463
      %1465 = vadd.xlane.f32.xlu0 %v1434
      %v1466 = vpop.xlane.xlu0 %1465
      %1467 = vst [vmem:[%s275] sm:$0xff] %v1436
      %1468 = vst [vmem:[%s275 + $0x8] sm:$0xff] %v1438
      %1469 = vst [vmem:[%s275 + $0x10] sm:$0xff] %v1440
      %1470 = vst [vmem:[%s275 + $0x18] sm:$0xff] %v1442
      %1471 = vst [vmem:[%s275 + $0x20] sm:$0xff] %v1444
      %1472 = vst [vmem:[%s275 + $0x28] sm:$0xff] %v1446
      %1473 = vst [vmem:[%s275 + $0x30] sm:$0xff] %v1448
      %1474 = vst [vmem:[%s275 + $0x38] sm:$0xff] %v1450
      %1475 = vst [vmem:[%s275 + $0x40] sm:$0xff] %v1452
      %1476 = vst [vmem:[%s275 + $0x48] sm:$0xff] %v1454
      %1477 = vst [vmem:[%s275 + $0x50] sm:$0xff] %v1456
      %1478 = vst [vmem:[%s275 + $0x58] sm:$0xff] %v1458
      %1479 = vst [vmem:[%s275 + $0x60] sm:$0xff] %v1460
      %1480 = vst [vmem:[%s275 + $0x68] sm:$0xff] %v1462
      %1481 = vst [vmem:[%s275 + $0x70] sm:$0xff] %v1464
      %1482 = vst [vmem:[%s275 + $0x78] sm:$0xff] %v1466
      %s1483 = smul.u32 16, %s17
      %p1484 = scmp.lt.s32.totalorder %s1483, 31
      %s1485 = scalar_select %p1484, %s1483, 31
      %s1486 = smul.addr %s1485, 8
      %s1487 = scalar_lea.vmem %s6, %s1486
      // Predicated region
      $region45: #{forward.1} parent=43 // pred_check
        %p1488 = pneg %p171
      $region46: #{forward.1} parent=43 // pred_check_branch
        %1490 = sbr.rel (%p1488) target = $region48
      $region47: #{forward.1} parent=43 // pred_region
        %s1491 = smul.u32 16, %s17
      $region48: #{forward.1} parent=43 // pred_fallthru
        _
    $region44: #{forward.1} parent=5 // pred_fallthru
      _
    %p1492 = scmp.le.s32.totalorder 2, %s12
    // Predicated region
    $region49: #{forward.1} parent=5 // pred_check
      %p1493 = pneg %p1492
    $region50: #{forward.1} parent=5 // pred_check_branch
      %1495 = sbr.rel (%p1493) target = $region52
    $region51: #{forward.1} parent=5 // pred_region
      %s1496 = ssub.s32 %s12, 2
      // Predicated region
      $region53: #{forward.1} parent=51 // pred_check
        %p1497 = pneg %p177
      $region54: #{forward.1} parent=51 // pred_check_branch
        %1499 = sbr.rel (%p1497) target = $region56
      $region55: #{forward.1} parent=51 // pred_region
        %s1500 = smul.u32 16, %s18
        %p1501 = scmp.lt.s32.totalorder %s1500, 31
        %s1502 = scalar_select %p1501, %s1500, 31
        %s1503 = smul.addr %s1502, 8
        %s1504 = scalar_lea.vmem %s6, %s1503
      $region56: #{forward.1} parent=51 // pred_fallthru
        _
    $region52: #{forward.1} parent=5 // pred_fallthru
      _
  $region6: #{forward.1} parent=0 // loop_footer
    %s16 = sadd.s32 1, %s12
  $region7: #{forward.1} parent=0 // loop_footer_branch
    %11 = sbr.rel target = $region3
  $region8: #{forward.1} parent=0 // loop_exit
    _

</llo_original>
